<compile_context>
chip_gen: v7x
topology: tpu7x:2x2x1
jax: 0.10.0
libtpu: 0.0.40
codegen_flags: <defaults>
</compile_context>

<pallas_src>
import jax
import jax.numpy as jnp
import numpy as np
from jax import lax
from jax.experimental import pallas as pl
from jax.experimental.pallas import tpu as pltpu


# ---------------------------------------------------------------------------
# Pallas kernels: one dense-Toeplitz matmul per grid step
# ---------------------------------------------------------------------------
def _toeplitz_conv_kernel(x_ref, a_ref, b_ref, o_ref):
    # x_ref: (block_n, K_pad) bf16   folded input rows (h, w, ci) lane-dense
    # a_ref: (K_pad, N_pad)   bf16   dense Toeplitz weights (padding absorbed)
    # b_ref: (1, N_pad)       f32    bias tiled over (ho, wo)
    # o_ref: (block_n, N_pad) f32    folded output rows (ho, wo, co) lane-dense
    acc = jnp.dot(x_ref[...], a_ref[...], preferred_element_type=jnp.float32)
    o_ref[...] = (acc + b_ref[...]).astype(o_ref.dtype)


def _toeplitz_conv_add_kernel(x_ref, a_ref, b_ref, prev_ref, o_ref):
    # Same as above, plus a fused elementwise add of `prev` (the other conv
    # path's output, already in this path's folded layout).
    acc = jnp.dot(x_ref[...], a_ref[...], preferred_element_type=jnp.float32)
    o_ref[...] = (acc + b_ref[...] + prev_ref[...]).astype(o_ref.dtype)


# ---------------------------------------------------------------------------
# Helpers
# ---------------------------------------------------------------------------
def _round_up(x, m):
    return pl.cdiv(x, m) * m


def _num_tensorcores():
    """Best-effort TensorCores-per-device (megacore chips -> 2)."""
    try:
        kind = jax.devices()[0].device_kind.lower()
    except Exception:
        return 1
    if any(tag in kind for tag in ("v7", "v4", "v5p")):
        return 2
    return 1


def _pick_block_n(bn, row_bytes, fixed_bytes, n_cores, vmem_budget):
    """Rows per grid step: largest multiple of 8 under the VMEM budget.
    On 1-TC chips (v5e/v6e) prefer a single grid step (per-step overhead
    ~0.35us); on megacore chips keep >= n_cores parallel grid steps."""
    block = _round_up(max(bn, 1), 8)
    if n_cores > 1 and bn > 8:
        block = min(block, _round_up(pl.cdiv(bn, n_cores), 8))
    avail = max(vmem_budget - fixed_bytes, row_bytes * 8)
    cap = max(8, (avail // max(row_bytes, 1)) // 8 * 8)
    return int(max(8, min(block, cap)))


def _full_toeplitz(w_oihw, h_in, w_in, ph, pw):
    """Dense Toeplitz matrix for a stride-1 conv with zero padding (ph, pw):
       A[(h*W+w)*Cin+ci, (ho*Wo+wo)*Cout+co] = w[co, ci, h+ph-ho, w+pw-wo],
       zero when the kernel offset falls outside [0,KH)x[0,KW).  The conv's
       spatial zero-padding is absorbed here, so x is never padded in HBM."""
    cout, cin, kh, kw = w_oihw.shape
    ho_n = h_in + 2 * ph - kh + 1
    wo_n = w_in + 2 * pw - kw + 1
    wk = jnp.transpose(w_oihw, (2, 3, 1, 0))                       # (KH,KW,Cin,Cout)
    dh = jnp.arange(h_in)[:, None] + ph - jnp.arange(ho_n)[None, :]   # (H, Ho)
    dw = jnp.arange(w_in)[:, None] + pw - jnp.arange(wo_n)[None, :]   # (W, Wo)
    valid = ((dh >= 0) & (dh < kh))[:, None, :, None] & \
            ((dw >= 0) & (dw < kw))[None, :, None, :]               # (H,W,Ho,Wo)
    a = wk[jnp.clip(dh, 0, kh - 1)[:, None, :, None],
           jnp.clip(dw, 0, kw - 1)[None, :, None, :]]               # (H,W,Ho,Wo,Cin,Cout)
    a = jnp.where(valid[..., None, None], a, 0.0)
    a = jnp.transpose(a, (0, 1, 4, 2, 3, 5))                        # (H,W,Cin,Ho,Wo,Cout)
    return a.reshape(h_in * w_in * cin, ho_n * wo_n * cout)


# ---------------------------------------------------------------------------
# Stride-1 2D conv (NHWC in / NHWC out) as one Toeplitz matmul per grid step
# ---------------------------------------------------------------------------
def conv2d_toeplitz_pallas(x_nhwc, w_oihw, b, padding, prev=None,
                           compute_dtype=jnp.bfloat16, vmem_budget=8 << 20):
    BN, H, W, Cin = x_nhwc.shape
    Cout, Cin_w, KH, KW = w_oihw.shape
    assert Cin_w == Cin
    ph, pw = int(padding[0]), int(padding[1])
    Ho, Wo = H + 2 * ph - KH + 1, W + 2 * pw - KW + 1
    K, N = H * W * Cin, Ho * Wo * Cout
    K_pad, N_pad = int(_round_up(K, 128)), int(_round_up(N, 128))
    cbytes = jnp.dtype(compute_dtype).itemsize

    # TODO(synk): large-spatial fallback (per-kh banded A) — see header.
    a_bytes = K_pad * N_pad * cbytes
    assert a_bytes <= (12 << 20), (
        f"dense Toeplitz weights too large for VMEM-resident form ({a_bytes} B)")

    # Weights -> dense Toeplitz, zero-padded so both dims are 128-aligned.
    A = _full_toeplitz(w_oihw, H, W, ph, pw).astype(compute_dtype)
    A = jnp.pad(A, ((0, K_pad - K), (0, N_pad - N)))
    bias_row = jnp.pad(jnp.tile(b.astype(jnp.float32), Ho * Wo),
                       (0, N_pad - N)).reshape(1, N_pad)

    # Fold (H, W, Cin) into one lane-dense axis; no spatial padding of x.
    xf = x_nhwc.reshape(BN, K).astype(compute_dtype)
    if K_pad != K:
        xf = jnp.pad(xf, ((0, 0), (0, K_pad - K)))

    fuse_prev = prev is not None
    if fuse_prev:
        assert prev.shape == (BN, Ho, Wo, Cout)
        pf = prev.reshape(BN, N).astype(jnp.float32)
        if N_pad != N:
            pf = jnp.pad(pf, ((0, 0), (0, N_pad - N)))

    # Generation-aware row tiling.
    n_cores = _num_tensorcores()
    row_bytes = 2 * (K_pad * cbytes + N_pad * 4) + (2 * N_pad * 4 if fuse_prev else 0)
    fixed_bytes = 2 * K_pad * N_pad * cbytes + 2 * N_pad * 4
    block_n = _pick_block_n(BN, row_bytes, fixed_bytes, n_cores, vmem_budget)

    BN_pad = int(_round_up(BN, block_n))
    if BN_pad != BN:
        # Accepted: small HBM pad copy only when the batch tail is ragged.
        xf = jnp.pad(xf, ((0, BN_pad - BN), (0, 0)))
        if fuse_prev:
            pf = jnp.pad(pf, ((0, BN_pad - BN), (0, 0)))

    in_specs = [
        pl.BlockSpec((block_n, K_pad), lambda i: (i, 0)),
        pl.BlockSpec((K_pad, N_pad), lambda i: (0, 0)),
        pl.BlockSpec((1, N_pad), lambda i: (0, 0)),
    ]
    args = [xf, A, bias_row]
    kernel = _toeplitz_conv_kernel
    if fuse_prev:
        in_specs.append(pl.BlockSpec((block_n, N_pad), lambda i: (i, 0)))
        args.append(pf)
        kernel = _toeplitz_conv_add_kernel

    cparams = dict(dimension_semantics=("parallel",))
    est_vmem = fixed_bytes + block_n * row_bytes + (1 << 20)
    if est_vmem > (12 << 20):
        cparams["vmem_limit_bytes"] = int(min(est_vmem * 5 // 4, 96 << 20))

    out = pl.pallas_call(
        kernel,
        out_shape=jax.ShapeDtypeStruct((BN_pad, N_pad), jnp.float32),
        grid_spec=pltpu.PrefetchScalarGridSpec(
            num_scalar_prefetch=0,
            grid=(BN_pad // block_n,),
            in_specs=in_specs,
            out_specs=pl.BlockSpec((block_n, N_pad), lambda i: (i, 0)),
        ),
        compiler_params=pltpu.CompilerParams(**cparams),
    )(*args)

    return out[:BN, :N].reshape(BN, Ho, Wo, Cout)


# ---------------------------------------------------------------------------
# Conv4d forward (mirrors the PyTorch module; 6-D permutes are plain-JAX glue)
# ---------------------------------------------------------------------------
def conv4d_forward(x, w1, b1, w2, b2, kernel_size, stride, padding,
                   compute_dtype=jnp.bfloat16):
    # TODO(synk): prune / prune_out2 (stride > 1) not implemented in Pallas path.
    assert tuple(stride) == (1, 1, 1, 1)
    bsz, inch, ha, wa, hb, wb = x.shape

    # ---- path 1: conv1 over (ha, wa), applied for every (hb, wb) location ----
    x1 = jnp.transpose(x, (0, 4, 5, 2, 3, 1)).reshape(bsz * hb * wb, ha, wa, inch)
    o1 = conv2d_toeplitz_pallas(x1, w1, b1, padding[:2], compute_dtype=compute_dtype)
    o_ha, o_wa, outch = o1.shape[1], o1.shape[2], o1.shape[3]
    o1_6d = o1.reshape(bsz, hb, wb, o_ha, o_wa, outch)

    # ---- path 2: conv2 over (hb, wb), applied for every (ha, wa) location ----
    x2 = jnp.transpose(x, (0, 2, 3, 4, 5, 1)).reshape(bsz * ha * wa, hb, wb, inch)
    o_hb = hb + 2 * int(padding[2]) - w2.shape[2] + 1
    o_wb = wb + 2 * int(padding[3]) - w2.shape[3] + 1

    fuse = (o_ha, o_wa) == (ha, wa) and (o_hb, o_wb) == (hb, wb)
    if fuse:
        # o1, transposed into path-2's folded output layout, is added in-kernel
        # (removes the separate output-sized XLA add round trip).
        prev = jnp.transpose(o1_6d, (0, 3, 4, 1, 2, 5)).reshape(
            bsz * ha * wa, hb, wb, outch)
        o2 = conv2d_toeplitz_pallas(x2, w2, b2, padding[2:], prev=prev,
                                    compute_dtype=compute_dtype)
        y = jnp.transpose(o2.reshape(bsz, ha, wa, hb, wb, outch),
                          (0, 5, 1, 2, 3, 4))
        return y

    # Unfused fallback (shape-mismatch / padding (...,0,0) branch of the module).
    o2 = conv2d_toeplitz_pallas(x2, w2, b2, padding[2:], compute_dtype=compute_dtype)
    out1 = jnp.transpose(o1_6d, (0, 5, 3, 4, 1, 2))                 # (b,co,o_ha,o_wa,hb,wb)
    out2 = jnp.transpose(o2.reshape(bsz, ha, wa, o_hb, o_wb, outch),
                         (0, 5, 1, 2, 3, 4))                        # (b,co,ha,wa,o_hb,o_wb)
    if out1.shape[-2:] != out2.shape[-2:] and tuple(padding[2:]) == (0, 0):
        out1 = out1.reshape(bsz, outch, o_ha, o_wa, -1).sum(-1)
        if out2.shape[-2:] == (1, 1):
            # Intended CenterPivot case: conv2 collapsed (hb,wb) to (1,1).
            # Squeeze only those axes so bsz==1 never drops the batch dim.
            out2 = out2.reshape(bsz, outch, ha, wa)
        else:
            out2 = jnp.squeeze(out2)   # matches torch .squeeze() fallback
    return out1 + out2


# ---------------------------------------------------------------------------
# Pure-JAX reference (correctness check only)
# ---------------------------------------------------------------------------
def _conv2d_ref(x_nchw, w, b, padding):
    out = lax.conv_general_dilated(
        x_nchw, w, window_strides=(1, 1),
        padding=[(padding[0], padding[0]), (padding[1], padding[1])],
        dimension_numbers=('NCHW', 'OIHW', 'NCHW'),
        precision=lax.Precision.HIGHEST)
    return out + b[None, :, None, None]


def conv4d_ref(x, w1, b1, w2, b2, padding):
    bsz, inch, ha, wa, hb, wb = x.shape
    o1 = jnp.transpose(x, (0, 4, 5, 1, 2, 3)).reshape(bsz * hb * wb, inch, ha, wa)
    o1 = _conv2d_ref(o1, w1, b1, padding[:2])
    outch = o1.shape[1]
    o1 = jnp.transpose(o1.reshape(bsz, hb, wb, outch, ha, wa), (0, 3, 4, 5, 1, 2))
    o2 = jnp.transpose(x, (0, 2, 3, 1, 4, 5)).reshape(bsz * ha * wa, inch, hb, wb)
    o2 = _conv2d_ref(o2, w2, b2, padding[2:])
    o2 = jnp.transpose(o2.reshape(bsz, ha, wa, outch, hb, wb), (0, 3, 1, 2, 4, 5))
    return o1 + o2


# ---------------------------------------------------------------------------
if __name__ == "__main__":
    # Module config (typical CVNet center-pivot block)
    in_channels, out_channels = 4, 8
    kernel_size = (3, 3, 3, 3)
    stride = (1, 1, 1, 1)
    padding = (1, 1, 1, 1)

    # Small correlation tensor: (bsz, inch, ha, wa, hb, wb)
    bsz, ha, wa, hb, wb = 2, 8, 8, 8, 8

    key = jax.random.PRNGKey(0)
    k_x, k_w1, k_b1, k_w2, k_b2 = jax.random.split(key, 5)
    x = jax.random.normal(k_x, (bsz, in_channels, ha, wa, hb, wb), jnp.float32)

    # PyTorch-like uniform init, bound 1/sqrt(fan_in)
    fan_in = in_channels * kernel_size[0] * kernel_size[1]
    bound = 1.0 / np.sqrt(fan_in)
    w1 = jax.random.uniform(k_w1, (out_channels, in_channels, 3, 3),
                            jnp.float32, -bound, bound)
    b1 = jax.random.uniform(k_b1, (out_channels,), jnp.float32, -bound, bound)
    w2 = jax.random.uniform(k_w2, (out_channels, in_channels, 3, 3),
                            jnp.float32, -bound, bound)
    b2 = jax.random.uniform(k_b2, (out_channels,), jnp.float32, -bound, bound)

    fwd = jax.jit(lambda *a: conv4d_forward(*a, kernel_size=kernel_size,
                                            stride=stride, padding=padding))
    y = jax.block_until_ready(fwd(x, w1, b1, w2, b2))
    assert y.shape == (bsz, out_channels, ha, wa, hb, wb), y.shape

    # Deliberate precision choice: the kernel uses bf16 operands with f32
    # accumulation, so the reference is fed the SAME bf16-quantized inputs
    # (bias stays f32, as in the kernel).  This keeps the tolerance tight
    # instead of silently loosening an f32-vs-bf16 comparison.
    q = lambda t: t.astype(jnp.bfloat16).astype(jnp.float32)
    y_ref = jax.block_until_ready(conv4d_ref(q(x), q(w1), b1, q(w2), b2, padding))
    np.testing.assert_allclose(np.asarray(y), np.asarray(y_ref),
                               rtol=1e-3, atol=1e-3)
    print("KERNEL_OK")
</pallas_src>

<mosaic_0001>
module attributes {stable_mosaic.version = 11 : i64} {
  func.func @_toeplitz_conv_kernel(%arg0: i32, %arg1: memref<128x256xbf16, #tpu.memory_space<vmem>>, %arg2: memref<256x512xbf16, #tpu.memory_space<vmem>>, %arg3: memref<1x512xf32, #tpu.memory_space<vmem>>, %arg4: memref<128x512xf32, #tpu.memory_space<vmem>>) attributes {dimension_semantics = [#tpu.dimension_semantics<parallel>], iteration_bounds = array<i64: 1>, scalar_prefetch = 0 : i64, scratch_operands = 0 : i64, tpu.core_type = #tpu.core_type<tc>, window_params = [{transform_indices = @transform_0, window_bounds = array<i64: 128, 256>}, {pipeline_mode = #tpu.pipeline_mode<synchronous>, transform_indices = @transform_1, window_bounds = array<i64: 256, 512>}, {pipeline_mode = #tpu.pipeline_mode<synchronous>, transform_indices = @transform_2, window_bounds = array<i64: 1, 512>}, {transform_indices = @transform_3, window_bounds = array<i64: 128, 512>}]} {
    %c0 = arith.constant 0 : index
    %c0_0 = arith.constant 0 : index
    %0 = vector.load %arg1[%c0, %c0_0] : memref<128x256xbf16, #tpu.memory_space<vmem>>, vector<128x256xbf16>
    %c0_1 = arith.constant 0 : index
    %c0_2 = arith.constant 0 : index
    %1 = vector.load %arg2[%c0_1, %c0_2] : memref<256x512xbf16, #tpu.memory_space<vmem>>, vector<256x512xbf16>
    %cst = arith.constant dense<0.000000e+00> : vector<128x512xf32>
    %2 = tpu.matmul %0, %1, %cst {dimension_numbers = #tpu.dot_dimension_numbers<[1], [0], [0], [1], [0, 0, 1, 1], [], []>} : vector<128x256xbf16>, vector<256x512xbf16>, vector<128x512xf32> -> vector<128x512xf32>
    %c0_3 = arith.constant 0 : index
    %c0_4 = arith.constant 0 : index
    %3 = vector.load %arg3[%c0_3, %c0_4] : memref<1x512xf32, #tpu.memory_space<vmem>>, vector<1x512xf32>
    %4 = vector.broadcast %3 : vector<1x512xf32> to vector<128x512xf32>
    %5 = arith.addf %2, %4 : vector<128x512xf32>
    %c0_5 = arith.constant 0 : index
    %c0_6 = arith.constant 0 : index
    %6 = vector.load %arg4[%c0_5, %c0_6] : memref<128x512xf32, #tpu.memory_space<vmem>>, vector<128x512xf32>
    tpu.vector_store %arg4[%c0_5, %c0_6], %5 {strides = array<i32>} : memref<128x512xf32, #tpu.memory_space<vmem>>, vector<128x512xf32>,
    return
  }
  func.func @transform_0(%arg0: i32) -> (i32, i32) {
    %c0_i32 = arith.constant 0 : i32
    %c0_i32_0 = arith.constant 0 : i32
    return %arg0, %c0_i32 : i32, i32
  }
  func.func @transform_1(%arg0: i32) -> (i32, i32) {
    %c0_i32 = arith.constant 0 : i32
    %c0_i32_0 = arith.constant 0 : i32
    %c0_i32_1 = arith.constant 0 : i32
    return %c0_i32, %c0_i32_0 : i32, i32
  }
  func.func @transform_2(%arg0: i32) -> (i32, i32) {
    %c0_i32 = arith.constant 0 : i32
    %c0_i32_0 = arith.constant 0 : i32
    %c0_i32_1 = arith.constant 0 : i32
    return %c0_i32, %c0_i32_0 : i32, i32
  }
  func.func @transform_3(%arg0: i32) -> (i32, i32) {
    %c0_i32 = arith.constant 0 : i32
    %c0_i32_0 = arith.constant 0 : i32
    return %arg0, %c0_i32 : i32, i32
  }
}

module attributes {stable_mosaic.version = 11 : i64} {
  func.func @_toeplitz_conv_add_kernel(%arg0: i32, %arg1: memref<128x256xbf16, #tpu.memory_space<vmem>>, %arg2: memref<256x512xbf16, #tpu.memory_space<vmem>>, %arg3: memref<1x512xf32, #tpu.memory_space<vmem>>, %arg4: memref<128x512xf32, #tpu.memory_space<vmem>>, %arg5: memref<128x512xf32, #tpu.memory_space<vmem>>) attributes {dimension_semantics = [#tpu.dimension_semantics<parallel>], iteration_bounds = array<i64: 1>, scalar_prefetch = 0 : i64, scratch_operands = 0 : i64, tpu.core_type = #tpu.core_type<tc>, window_params = [{transform_indices = @transform_0, window_bounds = array<i64: 128, 256>}, {pipeline_mode = #tpu.pipeline_mode<synchronous>, transform_indices = @transform_1, window_bounds = array<i64: 256, 512>}, {pipeline_mode = #tpu.pipeline_mode<synchronous>, transform_indices = @transform_2, window_bounds = array<i64: 1, 512>}, {transform_indices = @transform_3, window_bounds = array<i64: 128, 512>}, {transform_indices = @transform_4, window_bounds = array<i64: 128, 512>}]} {
    %c0 = arith.constant 0 : index
    %c0_0 = arith.constant 0 : index
    %0 = vector.load %arg1[%c0, %c0_0] : memref<128x256xbf16, #tpu.memory_space<vmem>>, vector<128x256xbf16>
    %c0_1 = arith.constant 0 : index
    %c0_2 = arith.constant 0 : index
    %1 = vector.load %arg2[%c0_1, %c0_2] : memref<256x512xbf16, #tpu.memory_space<vmem>>, vector<256x512xbf16>
    %cst = arith.constant dense<0.000000e+00> : vector<128x512xf32>
    %2 = tpu.matmul %0, %1, %cst {dimension_numbers = #tpu.dot_dimension_numbers<[1], [0], [0], [1], [0, 0, 1, 1], [], []>} : vector<128x256xbf16>, vector<256x512xbf16>, vector<128x512xf32> -> vector<128x512xf32>
    %c0_3 = arith.constant 0 : index
    %c0_4 = arith.constant 0 : index
    %3 = vector.load %arg3[%c0_3, %c0_4] : memref<1x512xf32, #tpu.memory_space<vmem>>, vector<1x512xf32>
    %4 = vector.broadcast %3 : vector<1x512xf32> to vector<128x512xf32>
    %5 = arith.addf %2, %4 : vector<128x512xf32>
    %c0_5 = arith.constant 0 : index
    %c0_6 = arith.constant 0 : index
    %6 = vector.load %arg4[%c0_5, %c0_6] : memref<128x512xf32, #tpu.memory_space<vmem>>, vector<128x512xf32>
    %7 = arith.addf %5, %6 : vector<128x512xf32>
    %c0_7 = arith.constant 0 : index
    %c0_8 = arith.constant 0 : index
    %8 = vector.load %arg5[%c0_7, %c0_8] : memref<128x512xf32, #tpu.memory_space<vmem>>, vector<128x512xf32>
    tpu.vector_store %arg5[%c0_7, %c0_8], %7 {strides = array<i32>} : memref<128x512xf32, #tpu.memory_space<vmem>>, vector<128x512xf32>,
    return
  }
  func.func @transform_0(%arg0: i32) -> (i32, i32) {
    %c0_i32 = arith.constant 0 : i32
    %c0_i32_0 = arith.constant 0 : i32
    return %arg0, %c0_i32 : i32, i32
  }
  func.func @transform_1(%arg0: i32) -> (i32, i32) {
    %c0_i32 = arith.constant 0 : i32
    %c0_i32_0 = arith.constant 0 : i32
    %c0_i32_1 = arith.constant 0 : i32
    return %c0_i32, %c0_i32_0 : i32, i32
  }
  func.func @transform_2(%arg0: i32) -> (i32, i32) {
    %c0_i32 = arith.constant 0 : i32
    %c0_i32_0 = arith.constant 0 : i32
    %c0_i32_1 = arith.constant 0 : i32
    return %c0_i32, %c0_i32_0 : i32, i32
  }
  func.func @transform_3(%arg0: i32) -> (i32, i32) {
    %c0_i32 = arith.constant 0 : i32
    %c0_i32_0 = arith.constant 0 : i32
    return %arg0, %c0_i32 : i32, i32
  }
  func.func @transform_4(%arg0: i32) -> (i32, i32) {
    %c0_i32 = arith.constant 0 : i32
    %c0_i32_0 = arith.constant 0 : i32
    return %arg0, %c0_i32 : i32, i32
  }
}

</mosaic_0001>

<llo_original>
// kernel: tile.13
$region0: #{tile.13}
  #allocation0 [shape = 's32[1]{0}', space=sflag, size = 0x4, scoped, tag = 'scoped memory for tile.13']
  %s0 = inlined_call_operand.vmem [shape: f32[8], index: 0, kind: input, shape index: {}]
  %s1 = inlined_call_operand.vmem [shape: f32[64,8], index: 1, kind: output, shape index: {}]
  // Predicated region
  $region2: #{tile.13} parent=0 // pred_check
    _
  $region3: #{tile.13} parent=0 // pred_check_branch
    %3 = sbr.rel (0) target = $region5
  $region4: #{tile.13} parent=0 // pred_region
    _
  $region5: #{tile.13} parent=0 // pred_fallthru
    _
  %v4 = vld [vmem:[%s0] ss:$0 sm:$0xff]
  %5 = vst [vmem:[%s1] sm:$0xff] %v4
  %s6 = scalar_lea.vmem %s1, 8
  %7 = vst [vmem:[%s6] sm:$0xff] %v4
  %s8 = scalar_lea.vmem %s1, 16
  %9 = vst [vmem:[%s8] sm:$0xff] %v4
  %s10 = scalar_lea.vmem %s1, 24
  %11 = vst [vmem:[%s10] sm:$0xff] %v4
  %s12 = scalar_lea.vmem %s1, 32
  %13 = vst [vmem:[%s12] sm:$0xff] %v4
  %s14 = scalar_lea.vmem %s1, 40
  %15 = vst [vmem:[%s14] sm:$0xff] %v4
  %s16 = scalar_lea.vmem %s1, 48
  %17 = vst [vmem:[%s16] sm:$0xff] %v4
  %s18 = scalar_lea.vmem %s1, 56
  %19 = vst [vmem:[%s18] sm:$0xff] %v4

// kernel: _lambda_.2
$region0: #{_lambda_.2}
  #allocation0 [shape = 'u32[]', space=smem, size = 0x4, offset = 0x4, fixed_abs, tag = 'smem constant byte address 0x4 - core index']
  #allocation1 [shape = 'u32[144,128]{1,0:T(1,128)}', space=vmem, size = 0x12000, scoped, tag = 'internal scratch']
  %s0 = inlined_call_operand.vmem [shape: bf16[128,256], index: 0, kind: input, shape index: {}]
  %s1 = inlined_call_operand.vmem [shape: bf16[256,512], index: 1, kind: input, shape index: {}]
  %s2 = inlined_call_operand.vmem [shape: f32[1,512], index: 2, kind: input, shape index: {}]
  %s3 = inlined_call_operand.vmem [shape: f32[128,512], index: 3, kind: output, shape index: {}]
  %s4 = sld [smem:[#allocation0]]
  $region22: #{_lambda_.2} parent=0
    _
  %s6 = ssub.s32 1, %s4
  %s7 = scalar_select 0, %s6, %s4
  // Predicated region
  $region2: #{_lambda_.2} parent=0 // pred_check
    _
  $region3: #{_lambda_.2} parent=0 // pred_check_branch
    %9 = sbr.rel (0) target = $region5
  $region4: #{_lambda_.2} parent=0 // pred_region
    _
  $region5: #{_lambda_.2} parent=0 // pred_fallthru
    _
  // Predicated region
  $region6: #{_lambda_.2} parent=0 // pred_check
    _
  $region7: #{_lambda_.2} parent=0 // pred_check_branch
    %11 = sbr.rel (0) target = $region9
  $region8: #{_lambda_.2} parent=0 // pred_region
    _
  $region9: #{_lambda_.2} parent=0 // pred_fallthru
    _
  // Predicated region
  $region10: #{_lambda_.2} parent=0 // pred_check
    _
  $region11: #{_lambda_.2} parent=0 // pred_check_branch
    %13 = sbr.rel (0) target = $region13
  $region12: #{_lambda_.2} parent=0 // pred_region
    _
  $region13: #{_lambda_.2} parent=0 // pred_fallthru
    _
  %v14 = vld [vmem:[%s0] sm:$0xff]
  %v15 = vld [vmem:[%s0 + $0x8] sm:$0xff]
  %v16 = vld [vmem:[%s0 + $0x10] sm:$0xff]
  %v17 = vld [vmem:[%s0 + $0x18] sm:$0xff]
  %v18 = vld [vmem:[%s0 + $0x20] sm:$0xff]
  %v19 = vld [vmem:[%s0 + $0x28] sm:$0xff]
  %v20 = vld [vmem:[%s0 + $0x30] sm:$0xff]
  %v21 = vld [vmem:[%s0 + $0x38] sm:$0xff]
  %v22 = vld [vmem:[%s0 + $0x40] sm:$0xff]
  %v23 = vld [vmem:[%s0 + $0x48] sm:$0xff]
  %v24 = vld [vmem:[%s0 + $0x50] sm:$0xff]
  %v25 = vld [vmem:[%s0 + $0x58] sm:$0xff]
  %v26 = vld [vmem:[%s0 + $0x60] sm:$0xff]
  %v27 = vld [vmem:[%s0 + $0x68] sm:$0xff]
  %v28 = vld [vmem:[%s0 + $0x70] sm:$0xff]
  %v29 = vld [vmem:[%s0 + $0x78] sm:$0xff]
  %v30 = vld [vmem:[%s1] sm:$0xff]
  %v31 = vld [vmem:[%s1 + $0x8] sm:$0xff]
  %v32 = vld [vmem:[%s1 + $0x10] sm:$0xff]
  %v33 = vld [vmem:[%s1 + $0x18] sm:$0xff]
  %v34 = vld [vmem:[%s1 + $0x20] sm:$0xff]
  %v35 = vld [vmem:[%s1 + $0x28] sm:$0xff]
  %v36 = vld [vmem:[%s1 + $0x30] sm:$0xff]
  %v37 = vld [vmem:[%s1 + $0x38] sm:$0xff]
  %v38 = vld [vmem:[%s1 + $0x40] sm:$0xff]
  %v39 = vld [vmem:[%s1 + $0x48] sm:$0xff]
  %v40 = vld [vmem:[%s1 + $0x50] sm:$0xff]
  %v41 = vld [vmem:[%s1 + $0x58] sm:$0xff]
  %v42 = vld [vmem:[%s1 + $0x60] sm:$0xff]
  %v43 = vld [vmem:[%s1 + $0x68] sm:$0xff]
  %v44 = vld [vmem:[%s1 + $0x70] sm:$0xff]
  %v45 = vld [vmem:[%s1 + $0x78] sm:$0xff]
  %v46 = vld [vmem:[%s1 + $0x80] sm:$0xff]
  %v47 = vld [vmem:[%s1 + $0x88] sm:$0xff]
  %v48 = vld [vmem:[%s1 + $0x90] sm:$0xff]
  %v49 = vld [vmem:[%s1 + $0x98] sm:$0xff]
  %v50 = vld [vmem:[%s1 + $0xa0] sm:$0xff]
  %v51 = vld [vmem:[%s1 + $0xa8] sm:$0xff]
  %v52 = vld [vmem:[%s1 + $0xb0] sm:$0xff]
  %v53 = vld [vmem:[%s1 + $0xb8] sm:$0xff]
  %v54 = vld [vmem:[%s1 + $0xc0] sm:$0xff]
  %v55 = vld [vmem:[%s1 + $0xc8] sm:$0xff]
  %v56 = vld [vmem:[%s1 + $0xd0] sm:$0xff]
  %v57 = vld [vmem:[%s1 + $0xd8] sm:$0xff]
  %v58 = vld [vmem:[%s1 + $0xe0] sm:$0xff]
  %v59 = vld [vmem:[%s1 + $0xe8] sm:$0xff]
  %v60 = vld [vmem:[%s1 + $0xf0] sm:$0xff]
  %v61 = vld [vmem:[%s1 + $0xf8] sm:$0xff]
  %v62 = vld [vmem:[%s1 + $0x100] sm:$0xff]
  %v63 = vld [vmem:[%s1 + $0x108] sm:$0xff]
  %v64 = vld [vmem:[%s1 + $0x110] sm:$0xff]
  %v65 = vld [vmem:[%s1 + $0x118] sm:$0xff]
  %v66 = vld [vmem:[%s1 + $0x120] sm:$0xff]
  %v67 = vld [vmem:[%s1 + $0x128] sm:$0xff]
  %v68 = vld [vmem:[%s1 + $0x130] sm:$0xff]
  %v69 = vld [vmem:[%s1 + $0x138] sm:$0xff]
  %v70 = vld [vmem:[%s1 + $0x140] sm:$0xff]
  %v71 = vld [vmem:[%s1 + $0x148] sm:$0xff]
  %v72 = vld [vmem:[%s1 + $0x150] sm:$0xff]
  %v73 = vld [vmem:[%s1 + $0x158] sm:$0xff]
  %v74 = vld [vmem:[%s1 + $0x160] sm:$0xff]
  %v75 = vld [vmem:[%s1 + $0x168] sm:$0xff]
  %v76 = vld [vmem:[%s1 + $0x170] sm:$0xff]
  %v77 = vld [vmem:[%s1 + $0x178] sm:$0xff]
  %v78 = vld [vmem:[%s1 + $0x180] sm:$0xff]
  %v79 = vld [vmem:[%s1 + $0x188] sm:$0xff]
  %v80 = vld [vmem:[%s1 + $0x190] sm:$0xff]
  %v81 = vld [vmem:[%s1 + $0x198] sm:$0xff]
  %v82 = vld [vmem:[%s1 + $0x1a0] sm:$0xff]
  %v83 = vld [vmem:[%s1 + $0x1a8] sm:$0xff]
  %v84 = vld [vmem:[%s1 + $0x1b0] sm:$0xff]
  %v85 = vld [vmem:[%s1 + $0x1b8] sm:$0xff]
  %v86 = vld [vmem:[%s1 + $0x1c0] sm:$0xff]
  %v87 = vld [vmem:[%s1 + $0x1c8] sm:$0xff]
  %v88 = vld [vmem:[%s1 + $0x1d0] sm:$0xff]
  %v89 = vld [vmem:[%s1 + $0x1d8] sm:$0xff]
  %v90 = vld [vmem:[%s1 + $0x1e0] sm:$0xff]
  %v91 = vld [vmem:[%s1 + $0x1e8] sm:$0xff]
  %v92 = vld [vmem:[%s1 + $0x1f0] sm:$0xff]
  %v93 = vld [vmem:[%s1 + $0x1f8] sm:$0xff]
  %v94 = vld [vmem:[%s2] sm:$0xf]
  %v96 = vlaneseq
  %v97 = vshrl.u32 %v96, 7
  %v98 = vsub.s32 0, %v97
  %v99 = vrot.slane %v94, %v98
  %v100 = vlaneseq
  %v101 = vshrl.u32 %v100, 7
  %v102 = vsub.s32 1, %v101
  %v103 = vrot.slane %v94, %v102
  %v104 = vlaneseq
  %v105 = vshrl.u32 %v104, 7
  %v106 = vsub.s32 2, %v105
  %v107 = vrot.slane %v94, %v106
  %v108 = vlaneseq
  %v109 = vshrl.u32 %v108, 7
  %v110 = vsub.s32 3, %v109
  %v111 = vrot.slane %v94, %v110
  %v132 = vunpack.c.l.b16 %v14
  %v133 = vunpack.c.h.b16 %v14
  %v134 = vunpack.c.l.b16 %v15
  %v135 = vunpack.c.h.b16 %v15
  %v136 = vunpack.c.l.b16 %v16
  %v137 = vunpack.c.h.b16 %v16
  %v138 = vunpack.c.l.b16 %v17
  %v139 = vunpack.c.h.b16 %v17
  %v140 = vunpack.c.l.b16 %v18
  %v141 = vunpack.c.h.b16 %v18
  %v142 = vunpack.c.l.b16 %v19
  %v143 = vunpack.c.h.b16 %v19
  %v144 = vunpack.c.l.b16 %v20
  %v145 = vunpack.c.h.b16 %v20
  %v146 = vunpack.c.l.b16 %v21
  %v147 = vunpack.c.h.b16 %v21
  %v148 = vunpack.c.l.b16 %v22
  %v149 = vunpack.c.h.b16 %v22
  %v150 = vunpack.c.l.b16 %v23
  %v151 = vunpack.c.h.b16 %v23
  %v152 = vunpack.c.l.b16 %v24
  %v153 = vunpack.c.h.b16 %v24
  %v154 = vunpack.c.l.b16 %v25
  %v155 = vunpack.c.h.b16 %v25
  %v156 = vunpack.c.l.b16 %v26
  %v157 = vunpack.c.h.b16 %v26
  %v158 = vunpack.c.l.b16 %v27
  %v159 = vunpack.c.h.b16 %v27
  %v160 = vunpack.c.l.b16 %v28
  %v161 = vunpack.c.h.b16 %v28
  %v162 = vunpack.c.l.b16 %v29
  %v163 = vunpack.c.h.b16 %v29
  %v164 = vpack.c.b16 %v134, %v132
  %v165 = vpack.c.b16 %v135, %v133
  %v166 = vpack.c.b16 %v138, %v136
  %v167 = vpack.c.b16 %v139, %v137
  %v168 = vpack.c.b16 %v142, %v140
  %v169 = vpack.c.b16 %v143, %v141
  %v170 = vpack.c.b16 %v146, %v144
  %v171 = vpack.c.b16 %v147, %v145
  %v172 = vpack.c.b16 %v150, %v148
  %v173 = vpack.c.b16 %v151, %v149
  %v174 = vpack.c.b16 %v154, %v152
  %v175 = vpack.c.b16 %v155, %v153
  %v176 = vpack.c.b16 %v158, %v156
  %v177 = vpack.c.b16 %v159, %v157
  %v178 = vpack.c.b16 %v162, %v160
  %v179 = vpack.c.b16 %v163, %v161
  %v260 = vunpack.c.l.b16 %v30
  %v261 = vunpack.c.h.b16 %v30
  %v262 = vunpack.c.l.b16 %v31
  %v263 = vunpack.c.h.b16 %v31
  %v264 = vunpack.c.l.b16 %v32
  %v265 = vunpack.c.h.b16 %v32
  %v266 = vunpack.c.l.b16 %v33
  %v267 = vunpack.c.h.b16 %v33
  %v268 = vunpack.c.l.b16 %v34
  %v269 = vunpack.c.h.b16 %v34
  %v270 = vunpack.c.l.b16 %v35
  %v271 = vunpack.c.h.b16 %v35
  %v272 = vunpack.c.l.b16 %v36
  %v273 = vunpack.c.h.b16 %v36
  %v274 = vunpack.c.l.b16 %v37
  %v275 = vunpack.c.h.b16 %v37
  %v276 = vunpack.c.l.b16 %v38
  %v277 = vunpack.c.h.b16 %v38
  %v278 = vunpack.c.l.b16 %v39
  %v279 = vunpack.c.h.b16 %v39
  %v280 = vunpack.c.l.b16 %v40
  %v281 = vunpack.c.h.b16 %v40
  %v282 = vunpack.c.l.b16 %v41
  %v283 = vunpack.c.h.b16 %v41
  %v284 = vunpack.c.l.b16 %v42
  %v285 = vunpack.c.h.b16 %v42
  %v286 = vunpack.c.l.b16 %v43
  %v287 = vunpack.c.h.b16 %v43
  %v288 = vunpack.c.l.b16 %v44
  %v289 = vunpack.c.h.b16 %v44
  %v290 = vunpack.c.l.b16 %v45
  %v291 = vunpack.c.h.b16 %v45
  %v292 = vunpack.c.l.b16 %v46
  %v293 = vunpack.c.h.b16 %v46
  %v294 = vunpack.c.l.b16 %v47
  %v295 = vunpack.c.h.b16 %v47
  %v296 = vunpack.c.l.b16 %v48
  %v297 = vunpack.c.h.b16 %v48
  %v298 = vunpack.c.l.b16 %v49
  %v299 = vunpack.c.h.b16 %v49
  %v300 = vunpack.c.l.b16 %v50
  %v301 = vunpack.c.h.b16 %v50
  %v302 = vunpack.c.l.b16 %v51
  %v303 = vunpack.c.h.b16 %v51
  %v304 = vunpack.c.l.b16 %v52
  %v305 = vunpack.c.h.b16 %v52
  %v306 = vunpack.c.l.b16 %v53
  %v307 = vunpack.c.h.b16 %v53
  %v308 = vunpack.c.l.b16 %v54
  %v309 = vunpack.c.h.b16 %v54
  %v310 = vunpack.c.l.b16 %v55
  %v311 = vunpack.c.h.b16 %v55
  %v312 = vunpack.c.l.b16 %v56
  %v313 = vunpack.c.h.b16 %v56
  %v314 = vunpack.c.l.b16 %v57
  %v315 = vunpack.c.h.b16 %v57
  %v316 = vunpack.c.l.b16 %v58
  %v317 = vunpack.c.h.b16 %v58
  %v318 = vunpack.c.l.b16 %v59
  %v319 = vunpack.c.h.b16 %v59
  %v320 = vunpack.c.l.b16 %v60
  %v321 = vunpack.c.h.b16 %v60
  %v322 = vunpack.c.l.b16 %v61
  %v323 = vunpack.c.h.b16 %v61
  %v324 = vunpack.c.l.b16 %v62
  %v325 = vunpack.c.h.b16 %v62
  %v326 = vunpack.c.l.b16 %v63
  %v327 = vunpack.c.h.b16 %v63
  %v328 = vunpack.c.l.b16 %v64
  %v329 = vunpack.c.h.b16 %v64
  %v330 = vunpack.c.l.b16 %v65
  %v331 = vunpack.c.h.b16 %v65
  %v332 = vunpack.c.l.b16 %v66
  %v333 = vunpack.c.h.b16 %v66
  %v334 = vunpack.c.l.b16 %v67
  %v335 = vunpack.c.h.b16 %v67
  %v336 = vunpack.c.l.b16 %v68
  %v337 = vunpack.c.h.b16 %v68
  %v338 = vunpack.c.l.b16 %v69
  %v339 = vunpack.c.h.b16 %v69
  %v340 = vunpack.c.l.b16 %v70
  %v341 = vunpack.c.h.b16 %v70
  %v342 = vunpack.c.l.b16 %v71
  %v343 = vunpack.c.h.b16 %v71
  %v344 = vunpack.c.l.b16 %v72
  %v345 = vunpack.c.h.b16 %v72
  %v346 = vunpack.c.l.b16 %v73
  %v347 = vunpack.c.h.b16 %v73
  %v348 = vunpack.c.l.b16 %v74
  %v349 = vunpack.c.h.b16 %v74
  %v350 = vunpack.c.l.b16 %v75
  %v351 = vunpack.c.h.b16 %v75
  %v352 = vunpack.c.l.b16 %v76
  %v353 = vunpack.c.h.b16 %v76
  %v354 = vunpack.c.l.b16 %v77
  %v355 = vunpack.c.h.b16 %v77
  %v356 = vunpack.c.l.b16 %v78
  %v357 = vunpack.c.h.b16 %v78
  %v358 = vunpack.c.l.b16 %v79
  %v359 = vunpack.c.h.b16 %v79
  %v360 = vunpack.c.l.b16 %v80
  %v361 = vunpack.c.h.b16 %v80
  %v362 = vunpack.c.l.b16 %v81
  %v363 = vunpack.c.h.b16 %v81
  %v364 = vunpack.c.l.b16 %v82
  %v365 = vunpack.c.h.b16 %v82
  %v366 = vunpack.c.l.b16 %v83
  %v367 = vunpack.c.h.b16 %v83
  %v368 = vunpack.c.l.b16 %v84
  %v369 = vunpack.c.h.b16 %v84
  %v370 = vunpack.c.l.b16 %v85
  %v371 = vunpack.c.h.b16 %v85
  %v372 = vunpack.c.l.b16 %v86
  %v373 = vunpack.c.h.b16 %v86
  %v374 = vunpack.c.l.b16 %v87
  %v375 = vunpack.c.h.b16 %v87
  %v376 = vunpack.c.l.b16 %v88
  %v377 = vunpack.c.h.b16 %v88
  %v378 = vunpack.c.l.b16 %v89
  %v379 = vunpack.c.h.b16 %v89
  %v380 = vunpack.c.l.b16 %v90
  %v381 = vunpack.c.h.b16 %v90
  %v382 = vunpack.c.l.b16 %v91
  %v383 = vunpack.c.h.b16 %v91
  %v384 = vunpack.c.l.b16 %v92
  %v385 = vunpack.c.h.b16 %v92
  %v386 = vunpack.c.l.b16 %v93
  %v387 = vunpack.c.h.b16 %v93
  %v388 = vpack.c.b16 %v264, %v260
  %v389 = vpack.c.b16 %v265, %v261
  %v390 = vpack.c.b16 %v266, %v262
  %v391 = vpack.c.b16 %v267, %v263
  %v392 = vpack.c.b16 %v272, %v268
  %v393 = vpack.c.b16 %v273, %v269
  %v394 = vpack.c.b16 %v274, %v270
  %v395 = vpack.c.b16 %v275, %v271
  %v396 = vpack.c.b16 %v280, %v276
  %v397 = vpack.c.b16 %v281, %v277
  %v398 = vpack.c.b16 %v282, %v278
  %v399 = vpack.c.b16 %v283, %v279
  %v400 = vpack.c.b16 %v288, %v284
  %v401 = vpack.c.b16 %v289, %v285
  %v402 = vpack.c.b16 %v290, %v286
  %v403 = vpack.c.b16 %v291, %v287
  %v404 = vpack.c.b16 %v296, %v292
  %v405 = vpack.c.b16 %v297, %v293
  %v406 = vpack.c.b16 %v298, %v294
  %v407 = vpack.c.b16 %v299, %v295
  %v408 = vpack.c.b16 %v304, %v300
  %v409 = vpack.c.b16 %v305, %v301
  %v410 = vpack.c.b16 %v306, %v302
  %v411 = vpack.c.b16 %v307, %v303
  %v412 = vpack.c.b16 %v312, %v308
  %v413 = vpack.c.b16 %v313, %v309
  %v414 = vpack.c.b16 %v314, %v310
  %v415 = vpack.c.b16 %v315, %v311
  %v416 = vpack.c.b16 %v320, %v316
  %v417 = vpack.c.b16 %v321, %v317
  %v418 = vpack.c.b16 %v322, %v318
  %v419 = vpack.c.b16 %v323, %v319
  %v420 = vpack.c.b16 %v328, %v324
  %v421 = vpack.c.b16 %v329, %v325
  %v422 = vpack.c.b16 %v330, %v326
  %v423 = vpack.c.b16 %v331, %v327
  %v424 = vpack.c.b16 %v336, %v332
  %v425 = vpack.c.b16 %v337, %v333
  %v426 = vpack.c.b16 %v338, %v334
  %v427 = vpack.c.b16 %v339, %v335
  %v428 = vpack.c.b16 %v344, %v340
  %v429 = vpack.c.b16 %v345, %v341
  %v430 = vpack.c.b16 %v346, %v342
  %v431 = vpack.c.b16 %v347, %v343
  %v432 = vpack.c.b16 %v352, %v348
  %v433 = vpack.c.b16 %v353, %v349
  %v434 = vpack.c.b16 %v354, %v350
  %v435 = vpack.c.b16 %v355, %v351
  %v436 = vpack.c.b16 %v360, %v356
  %v437 = vpack.c.b16 %v361, %v357
  %v438 = vpack.c.b16 %v362, %v358
  %v439 = vpack.c.b16 %v363, %v359
  %v440 = vpack.c.b16 %v368, %v364
  %v441 = vpack.c.b16 %v369, %v365
  %v442 = vpack.c.b16 %v370, %v366
  %v443 = vpack.c.b16 %v371, %v367
  %v444 = vpack.c.b16 %v376, %v372
  %v445 = vpack.c.b16 %v377, %v373
  %v446 = vpack.c.b16 %v378, %v374
  %v447 = vpack.c.b16 %v379, %v375
  %v448 = vpack.c.b16 %v384, %v380
  %v449 = vpack.c.b16 %v385, %v381
  %v450 = vpack.c.b16 %v386, %v382
  %v451 = vpack.c.b16 %v387, %v383
  %516 = vmatprep.subr.bf16.mxu0 %v389
  %517 = vmatpush1.bf16.msra.mxu0 %v388
  %518 = vmatprep.subr.bf16.mxu0 %v393
  %519 = vmatpush1.bf16.msra.mxu0 %v392
  %520 = vmatprep.subr.bf16.mxu0 %v397
  %521 = vmatpush1.bf16.msra.mxu0 %v396
  %522 = vmatprep.subr.bf16.mxu0 %v401
  %523 = vmatpush1.bf16.msra.mxu0 %v400
  %524 = vmatprep.subr.bf16.mxu0 %v405
  %525 = vmatpush1.bf16.msra.mxu0 %v404
  %526 = vmatprep.subr.bf16.mxu0 %v409
  %527 = vmatpush1.bf16.msra.mxu0 %v408
  %528 = vmatprep.subr.bf16.mxu0 %v413
  %529 = vmatpush1.bf16.msra.mxu0 %v412
  %530 = vmatprep.subr.bf16.mxu0 %v417
  %531 = vmatpush1.bf16.msra.mxu0 %v416
  %532 = vmatprep.subr.bf16.mxu0 %v421
  %533 = vmatpush1.bf16.msra.mxu0 %v420
  %534 = vmatprep.subr.bf16.mxu0 %v425
  %535 = vmatpush1.bf16.msra.mxu0 %v424
  %536 = vmatprep.subr.bf16.mxu0 %v429
  %537 = vmatpush1.bf16.msra.mxu0 %v428
  %538 = vmatprep.subr.bf16.mxu0 %v433
  %539 = vmatpush1.bf16.msra.mxu0 %v432
  %540 = vmatprep.subr.bf16.mxu0 %v437
  %541 = vmatpush1.bf16.msra.mxu0 %v436
  %542 = vmatprep.subr.bf16.mxu0 %v441
  %543 = vmatpush1.bf16.msra.mxu0 %v440
  %544 = vmatprep.subr.bf16.mxu0 %v445
  %545 = vmatpush1.bf16.msra.mxu0 %v444
  %546 = vmatprep.subr.bf16.mxu0 %v449
  %547 = vmatpush1.bf16.msra.mxu0 %v448
  %548 = vmatprep.mubr.bf16.mxu0 %v165
  %549 = vmatmul.mubr.bf16.gmra.mrb[0].mxu0 %v164
  %v550 = vpop.f32.mrb[0].mxu0
  %v551 = vadd.f32 %v99, %v550
  %v552 = vpop.f32.mrb[0].mxu0
  %v553 = vadd.f32 %v103, %v552
  %v554 = vpop.f32.mrb[0].mxu0
  %v555 = vadd.f32 %v99, %v554
  %v556 = vpop.f32.mrb[0].mxu0
  %v557 = vadd.f32 %v103, %v556
  %558 = vmatprep.mubr.bf16.mxu0 %v167
  %559 = vmatmul.mubr.bf16.gmra.mrb[0].mxu0 %v166
  %v560 = vpop.f32.mrb[0].mxu0
  %v561 = vadd.f32 %v99, %v560
  %v562 = vpop.f32.mrb[0].mxu0
  %v563 = vadd.f32 %v103, %v562
  %v564 = vpop.f32.mrb[0].mxu0
  %v565 = vadd.f32 %v99, %v564
  %v566 = vpop.f32.mrb[0].mxu0
  %v567 = vadd.f32 %v103, %v566
  %568 = vmatprep.mubr.bf16.mxu0 %v169
  %569 = vmatmul.mubr.bf16.gmra.mrb[0].mxu0 %v168
  %v570 = vpop.f32.mrb[0].mxu0
  %v571 = vadd.f32 %v99, %v570
  %v572 = vpop.f32.mrb[0].mxu0
  %v573 = vadd.f32 %v103, %v572
  %v574 = vpop.f32.mrb[0].mxu0
  %v575 = vadd.f32 %v99, %v574
  %v576 = vpop.f32.mrb[0].mxu0
  %v577 = vadd.f32 %v103, %v576
  %578 = vmatprep.mubr.bf16.mxu0 %v171
  %579 = vmatmul.mubr.bf16.gmra.mrb[0].mxu0 %v170
  %v580 = vpop.f32.mrb[0].mxu0
  %v581 = vadd.f32 %v99, %v580
  %v582 = vpop.f32.mrb[0].mxu0
  %v583 = vadd.f32 %v103, %v582
  %v584 = vpop.f32.mrb[0].mxu0
  %v585 = vadd.f32 %v99, %v584
  %v586 = vpop.f32.mrb[0].mxu0
  %v587 = vadd.f32 %v103, %v586
  %588 = vmatprep.mubr.bf16.mxu0 %v173
  %589 = vmatmul.mubr.bf16.gmra.mrb[0].mxu0 %v172
  %v590 = vpop.f32.mrb[0].mxu0
  %v591 = vadd.f32 %v99, %v590
  %v592 = vpop.f32.mrb[0].mxu0
  %v593 = vadd.f32 %v103, %v592
  %v594 = vpop.f32.mrb[0].mxu0
  %v595 = vadd.f32 %v99, %v594
  %v596 = vpop.f32.mrb[0].mxu0
  %v597 = vadd.f32 %v103, %v596
  %598 = vmatprep.mubr.bf16.mxu0 %v175
  %599 = vmatmul.mubr.bf16.gmra.mrb[0].mxu0 %v174
  %v600 = vpop.f32.mrb[0].mxu0
  %v601 = vadd.f32 %v99, %v600
  %v602 = vpop.f32.mrb[0].mxu0
  %v603 = vadd.f32 %v103, %v602
  %v604 = vpop.f32.mrb[0].mxu0
  %v605 = vadd.f32 %v99, %v604
  %v606 = vpop.f32.mrb[0].mxu0
  %v607 = vadd.f32 %v103, %v606
  %608 = vmatprep.mubr.bf16.mxu0 %v177
  %609 = vmatmul.mubr.bf16.gmra.mrb[0].mxu0 %v176
  %v610 = vpop.f32.mrb[0].mxu0
  %v611 = vadd.f32 %v99, %v610
  %v612 = vpop.f32.mrb[0].mxu0
  %v613 = vadd.f32 %v103, %v612
  %v614 = vpop.f32.mrb[0].mxu0
  %v615 = vadd.f32 %v99, %v614
  %v616 = vpop.f32.mrb[0].mxu0
  %v617 = vadd.f32 %v103, %v616
  %618 = vmatprep.mubr.bf16.mxu0 %v179
  %619 = vmatmul.mubr.bf16.gmra.mrb[0].mxu0 %v178
  %v620 = vpop.f32.mrb[0].mxu0
  %v621 = vadd.f32 %v99, %v620
  %v622 = vpop.f32.mrb[0].mxu0
  %v623 = vadd.f32 %v103, %v622
  %v624 = vpop.f32.mrb[0].mxu0
  %v625 = vadd.f32 %v99, %v624
  %v626 = vpop.f32.mrb[0].mxu0
  %v627 = vadd.f32 %v103, %v626
  %628 = vdwg.mxu0
  %629 = vmatprep.subr.bf16.mxu0 %v391
  %630 = vmatpush1.bf16.msra.mxu0 %v390
  %631 = vmatprep.subr.bf16.mxu0 %v395
  %632 = vmatpush1.bf16.msra.mxu0 %v394
  %633 = vmatprep.subr.bf16.mxu0 %v399
  %634 = vmatpush1.bf16.msra.mxu0 %v398
  %635 = vmatprep.subr.bf16.mxu0 %v403
  %636 = vmatpush1.bf16.msra.mxu0 %v402
  %637 = vmatprep.subr.bf16.mxu0 %v407
  %638 = vmatpush1.bf16.msra.mxu0 %v406
  %639 = vmatprep.subr.bf16.mxu0 %v411
  %640 = vmatpush1.bf16.msra.mxu0 %v410
  %641 = vmatprep.subr.bf16.mxu0 %v415
  %642 = vmatpush1.bf16.msra.mxu0 %v414
  %643 = vmatprep.subr.bf16.mxu0 %v419
  %644 = vmatpush1.bf16.msra.mxu0 %v418
  %645 = vmatprep.subr.bf16.mxu0 %v423
  %646 = vmatpush1.bf16.msra.mxu0 %v422
  %647 = vmatprep.subr.bf16.mxu0 %v427
  %648 = vmatpush1.bf16.msra.mxu0 %v426
  %649 = vmatprep.subr.bf16.mxu0 %v431
  %650 = vmatpush1.bf16.msra.mxu0 %v430
  %651 = vmatprep.subr.bf16.mxu0 %v435
  %652 = vmatpush1.bf16.msra.mxu0 %v434
  %653 = vmatprep.subr.bf16.mxu0 %v439
  %654 = vmatpush1.bf16.msra.mxu0 %v438
  %655 = vmatprep.subr.bf16.mxu0 %v443
  %656 = vmatpush1.bf16.msra.mxu0 %v442
  %657 = vmatprep.subr.bf16.mxu0 %v447
  %658 = vmatpush1.bf16.msra.mxu0 %v446
  %659 = vmatprep.subr.bf16.mxu0 %v451
  %660 = vmatpush1.bf16.msra.mxu0 %v450
  %661 = vmatprep.mubr.bf16.mxu0 %v165
  %662 = vmatmul.mubr.bf16.gmra.mrb[0].mxu0 %v164
  %v663 = vpop.f32.mrb[0].mxu0
  %v664 = vadd.f32 %v107, %v663
  %v665 = vpop.f32.mrb[0].mxu0
  %v666 = vadd.f32 %v111, %v665
  %v667 = vpop.f32.mrb[0].mxu0
  %v668 = vadd.f32 %v107, %v667
  %v669 = vpop.f32.mrb[0].mxu0
  %v670 = vadd.f32 %v111, %v669
  %671 = vmatprep.mubr.bf16.mxu0 %v167
  %672 = vmatmul.mubr.bf16.gmra.mrb[0].mxu0 %v166
  %v673 = vpop.f32.mrb[0].mxu0
  %v674 = vadd.f32 %v107, %v673
  %v675 = vpop.f32.mrb[0].mxu0
  %v676 = vadd.f32 %v111, %v675
  %v677 = vpop.f32.mrb[0].mxu0
  %v678 = vadd.f32 %v107, %v677
  %v679 = vpop.f32.mrb[0].mxu0
  %v680 = vadd.f32 %v111, %v679
  %681 = vmatprep.mubr.bf16.mxu0 %v169
  %682 = vmatmul.mubr.bf16.gmra.mrb[0].mxu0 %v168
  %v683 = vpop.f32.mrb[0].mxu0
  %v684 = vadd.f32 %v107, %v683
  %v685 = vpop.f32.mrb[0].mxu0
  %v686 = vadd.f32 %v111, %v685
  %v687 = vpop.f32.mrb[0].mxu0
  %v688 = vadd.f32 %v107, %v687
  %v689 = vpop.f32.mrb[0].mxu0
  %v690 = vadd.f32 %v111, %v689
  %691 = vmatprep.mubr.bf16.mxu0 %v171
  %692 = vmatmul.mubr.bf16.gmra.mrb[0].mxu0 %v170
  %v693 = vpop.f32.mrb[0].mxu0
  %v694 = vadd.f32 %v107, %v693
  %v695 = vpop.f32.mrb[0].mxu0
  %v696 = vadd.f32 %v111, %v695
  %v697 = vpop.f32.mrb[0].mxu0
  %v698 = vadd.f32 %v107, %v697
  %v699 = vpop.f32.mrb[0].mxu0
  %v700 = vadd.f32 %v111, %v699
  %701 = vmatprep.mubr.bf16.mxu0 %v173
  %702 = vmatmul.mubr.bf16.gmra.mrb[0].mxu0 %v172
  %v703 = vpop.f32.mrb[0].mxu0
  %v704 = vadd.f32 %v107, %v703
  %v705 = vpop.f32.mrb[0].mxu0
  %v706 = vadd.f32 %v111, %v705
  %v707 = vpop.f32.mrb[0].mxu0
  %v708 = vadd.f32 %v107, %v707
  %v709 = vpop.f32.mrb[0].mxu0
  %v710 = vadd.f32 %v111, %v709
  %711 = vmatprep.mubr.bf16.mxu0 %v175
  %712 = vmatmul.mubr.bf16.gmra.mrb[0].mxu0 %v174
  %v713 = vpop.f32.mrb[0].mxu0
  %v714 = vadd.f32 %v107, %v713
  %v715 = vpop.f32.mrb[0].mxu0
  %v716 = vadd.f32 %v111, %v715
  %v717 = vpop.f32.mrb[0].mxu0
  %v718 = vadd.f32 %v107, %v717
  %v719 = vpop.f32.mrb[0].mxu0
  %v720 = vadd.f32 %v111, %v719
  %721 = vmatprep.mubr.bf16.mxu0 %v177
  %722 = vmatmul.mubr.bf16.gmra.mrb[0].mxu0 %v176
  %v723 = vpop.f32.mrb[0].mxu0
  %v724 = vadd.f32 %v107, %v723
  %v725 = vpop.f32.mrb[0].mxu0
  %v726 = vadd.f32 %v111, %v725
  %v727 = vpop.f32.mrb[0].mxu0
  %v728 = vadd.f32 %v107, %v727
  %v729 = vpop.f32.mrb[0].mxu0
  %v730 = vadd.f32 %v111, %v729
  %731 = vmatprep.mubr.bf16.mxu0 %v179
  %732 = vmatmul.mubr.bf16.gmra.mrb[0].mxu0 %v178
  %v733 = vpop.f32.mrb[0].mxu0
  %v734 = vadd.f32 %v107, %v733
  %v735 = vpop.f32.mrb[0].mxu0
  %v736 = vadd.f32 %v111, %v735
  %v737 = vpop.f32.mrb[0].mxu0
  %v738 = vadd.f32 %v107, %v737
  %v739 = vpop.f32.mrb[0].mxu0
  %v740 = vadd.f32 %v111, %v739
  %741 = vdwg.mxu0
  %742 = vst [vmem:[%s3] sm:$0xff] %v551
  %743 = vst [vmem:[%s3 + $0x8] sm:$0xff] %v553
  %744 = vst [vmem:[%s3 + $0x10] sm:$0xff] %v664
  %745 = vst [vmem:[%s3 + $0x18] sm:$0xff] %v666
  %746 = vst [vmem:[%s3 + $0x20] sm:$0xff] %v555
  %747 = vst [vmem:[%s3 + $0x28] sm:$0xff] %v557
  %748 = vst [vmem:[%s3 + $0x30] sm:$0xff] %v668
  %749 = vst [vmem:[%s3 + $0x38] sm:$0xff] %v670
  %750 = vst [vmem:[%s3 + $0x40] sm:$0xff] %v561
  %751 = vst [vmem:[%s3 + $0x48] sm:$0xff] %v563
  %752 = vst [vmem:[%s3 + $0x50] sm:$0xff] %v674
  %753 = vst [vmem:[%s3 + $0x58] sm:$0xff] %v676
  %754 = vst [vmem:[%s3 + $0x60] sm:$0xff] %v565
  %755 = vst [vmem:[%s3 + $0x68] sm:$0xff] %v567
  %756 = vst [vmem:[%s3 + $0x70] sm:$0xff] %v678
  %757 = vst [vmem:[%s3 + $0x78] sm:$0xff] %v680
  %758 = vst [vmem:[%s3 + $0x80] sm:$0xff] %v571
  %759 = vst [vmem:[%s3 + $0x88] sm:$0xff] %v573
  %760 = vst [vmem:[%s3 + $0x90] sm:$0xff] %v684
  %761 = vst [vmem:[%s3 + $0x98] sm:$0xff] %v686
  %762 = vst [vmem:[%s3 + $0xa0] sm:$0xff] %v575
  %763 = vst [vmem:[%s3 + $0xa8] sm:$0xff] %v577
  %764 = vst [vmem:[%s3 + $0xb0] sm:$0xff] %v688
  %765 = vst [vmem:[%s3 + $0xb8] sm:$0xff] %v690
  %766 = vst [vmem:[%s3 + $0xc0] sm:$0xff] %v581
  %767 = vst [vmem:[%s3 + $0xc8] sm:$0xff] %v583
  %768 = vst [vmem:[%s3 + $0xd0] sm:$0xff] %v694
  %769 = vst [vmem:[%s3 + $0xd8] sm:$0xff] %v696
  %770 = vst [vmem:[%s3 + $0xe0] sm:$0xff] %v585
  %771 = vst [vmem:[%s3 + $0xe8] sm:$0xff] %v587
  %772 = vst [vmem:[%s3 + $0xf0] sm:$0xff] %v698
  %773 = vst [vmem:[%s3 + $0xf8] sm:$0xff] %v700
  %774 = vst [vmem:[%s3 + $0x100] sm:$0xff] %v591
  %775 = vst [vmem:[%s3 + $0x108] sm:$0xff] %v593
  %776 = vst [vmem:[%s3 + $0x110] sm:$0xff] %v704
  %777 = vst [vmem:[%s3 + $0x118] sm:$0xff] %v706
  %778 = vst [vmem:[%s3 + $0x120] sm:$0xff] %v595
  %779 = vst [vmem:[%s3 + $0x128] sm:$0xff] %v597
  %780 = vst [vmem:[%s3 + $0x130] sm:$0xff] %v708
  %781 = vst [vmem:[%s3 + $0x138] sm:$0xff] %v710
  %782 = vst [vmem:[%s3 + $0x140] sm:$0xff] %v601
  %783 = vst [vmem:[%s3 + $0x148] sm:$0xff] %v603
  %784 = vst [vmem:[%s3 + $0x150] sm:$0xff] %v714
  %785 = vst [vmem:[%s3 + $0x158] sm:$0xff] %v716
  %786 = vst [vmem:[%s3 + $0x160] sm:$0xff] %v605
  %787 = vst [vmem:[%s3 + $0x168] sm:$0xff] %v607
  %788 = vst [vmem:[%s3 + $0x170] sm:$0xff] %v718
  %789 = vst [vmem:[%s3 + $0x178] sm:$0xff] %v720
  %790 = vst [vmem:[%s3 + $0x180] sm:$0xff] %v611
  %791 = vst [vmem:[%s3 + $0x188] sm:$0xff] %v613
  %792 = vst [vmem:[%s3 + $0x190] sm:$0xff] %v724
  %793 = vst [vmem:[%s3 + $0x198] sm:$0xff] %v726
  %794 = vst [vmem:[%s3 + $0x1a0] sm:$0xff] %v615
  %795 = vst [vmem:[%s3 + $0x1a8] sm:$0xff] %v617
  %796 = vst [vmem:[%s3 + $0x1b0] sm:$0xff] %v728
  %797 = vst [vmem:[%s3 + $0x1b8] sm:$0xff] %v730
  %798 = vst [vmem:[%s3 + $0x1c0] sm:$0xff] %v621
  %799 = vst [vmem:[%s3 + $0x1c8] sm:$0xff] %v623
  %800 = vst [vmem:[%s3 + $0x1d0] sm:$0xff] %v734
  %801 = vst [vmem:[%s3 + $0x1d8] sm:$0xff] %v736
  %802 = vst [vmem:[%s3 + $0x1e0] sm:$0xff] %v625
  %803 = vst [vmem:[%s3 + $0x1e8] sm:$0xff] %v627
  %804 = vst [vmem:[%s3 + $0x1f0] sm:$0xff] %v738
  %805 = vst [vmem:[%s3 + $0x1f8] sm:$0xff] %v740
  // Predicated region
  $region14: #{_lambda_.2} parent=0 // pred_check
    _
  $region15: #{_lambda_.2} parent=0 // pred_check_branch
    %807 = sbr.rel (0) target = $region17
  $region16: #{_lambda_.2} parent=0 // pred_region
    _
  $region17: #{_lambda_.2} parent=0 // pred_fallthru
    _
  // Predicated region
  $region18: #{_lambda_.2} parent=0 // pred_check
    _
  $region19: #{_lambda_.2} parent=0 // pred_check_branch
    %809 = sbr.rel (0) target = $region21
  $region20: #{_lambda_.2} parent=0 // pred_region
    _
  $region21: #{_lambda_.2} parent=0 // pred_fallthru
    _

// kernel: _lambda_.3
$region0: #{_lambda_.3}
  #allocation0 [shape = 'u32[]', space=smem, size = 0x4, offset = 0x4, fixed_abs, tag = 'smem constant byte address 0x4 - core index']
  #allocation1 [shape = 'u32[144,128]{1,0:T(1,128)}', space=vmem, size = 0x12000, scoped, tag = 'internal scratch']
  %s0 = inlined_call_operand.vmem [shape: bf16[128,256], index: 0, kind: input, shape index: {}]
  %s1 = inlined_call_operand.vmem [shape: bf16[256,512], index: 1, kind: input, shape index: {}]
  %s2 = inlined_call_operand.vmem [shape: f32[1,512], index: 2, kind: input, shape index: {}]
  %s3 = inlined_call_operand.vmem [shape: f32[128,512], index: 3, kind: input, shape index: {}]
  %s4 = inlined_call_operand.vmem [shape: f32[128,512], index: 4, kind: output, shape index: {}]
  %s5 = sld [smem:[#allocation0]]
  $region26: #{_lambda_.3} parent=0
    _
  %s7 = ssub.s32 1, %s5
  %s8 = scalar_select 0, %s7, %s5
  // Predicated region
  $region2: #{_lambda_.3} parent=0 // pred_check
    _
  $region3: #{_lambda_.3} parent=0 // pred_check_branch
    %10 = sbr.rel (0) target = $region5
  $region4: #{_lambda_.3} parent=0 // pred_region
    _
  $region5: #{_lambda_.3} parent=0 // pred_fallthru
    _
  // Predicated region
  $region6: #{_lambda_.3} parent=0 // pred_check
    _
  $region7: #{_lambda_.3} parent=0 // pred_check_branch
    %12 = sbr.rel (0) target = $region9
  $region8: #{_lambda_.3} parent=0 // pred_region
    _
  $region9: #{_lambda_.3} parent=0 // pred_fallthru
    _
  // Predicated region
  $region10: #{_lambda_.3} parent=0 // pred_check
    _
  $region11: #{_lambda_.3} parent=0 // pred_check_branch
    %14 = sbr.rel (0) target = $region13
  $region12: #{_lambda_.3} parent=0 // pred_region
    _
  $region13: #{_lambda_.3} parent=0 // pred_fallthru
    _
  // Predicated region
  $region14: #{_lambda_.3} parent=0 // pred_check
    _
  $region15: #{_lambda_.3} parent=0 // pred_check_branch
    %16 = sbr.rel (0) target = $region17
  $region16: #{_lambda_.3} parent=0 // pred_region
    _
  $region17: #{_lambda_.3} parent=0 // pred_fallthru
    _
  %v17 = vld [vmem:[%s0] sm:$0xff]
  %v18 = vld [vmem:[%s0 + $0x8] sm:$0xff]
  %v19 = vld [vmem:[%s0 + $0x10] sm:$0xff]
  %v20 = vld [vmem:[%s0 + $0x18] sm:$0xff]
  %v21 = vld [vmem:[%s0 + $0x20] sm:$0xff]
  %v22 = vld [vmem:[%s0 + $0x28] sm:$0xff]
  %v23 = vld [vmem:[%s0 + $0x30] sm:$0xff]
  %v24 = vld [vmem:[%s0 + $0x38] sm:$0xff]
  %v25 = vld [vmem:[%s0 + $0x40] sm:$0xff]
  %v26 = vld [vmem:[%s0 + $0x48] sm:$0xff]
  %v27 = vld [vmem:[%s0 + $0x50] sm:$0xff]
  %v28 = vld [vmem:[%s0 + $0x58] sm:$0xff]
  %v29 = vld [vmem:[%s0 + $0x60] sm:$0xff]
  %v30 = vld [vmem:[%s0 + $0x68] sm:$0xff]
  %v31 = vld [vmem:[%s0 + $0x70] sm:$0xff]
  %v32 = vld [vmem:[%s0 + $0x78] sm:$0xff]
  %v33 = vld [vmem:[%s1] sm:$0xff]
  %v34 = vld [vmem:[%s1 + $0x8] sm:$0xff]
  %v35 = vld [vmem:[%s1 + $0x10] sm:$0xff]
  %v36 = vld [vmem:[%s1 + $0x18] sm:$0xff]
  %v37 = vld [vmem:[%s1 + $0x20] sm:$0xff]
  %v38 = vld [vmem:[%s1 + $0x28] sm:$0xff]
  %v39 = vld [vmem:[%s1 + $0x30] sm:$0xff]
  %v40 = vld [vmem:[%s1 + $0x38] sm:$0xff]
  %v41 = vld [vmem:[%s1 + $0x40] sm:$0xff]
  %v42 = vld [vmem:[%s1 + $0x48] sm:$0xff]
  %v43 = vld [vmem:[%s1 + $0x50] sm:$0xff]
  %v44 = vld [vmem:[%s1 + $0x58] sm:$0xff]
  %v45 = vld [vmem:[%s1 + $0x60] sm:$0xff]
  %v46 = vld [vmem:[%s1 + $0x68] sm:$0xff]
  %v47 = vld [vmem:[%s1 + $0x70] sm:$0xff]
  %v48 = vld [vmem:[%s1 + $0x78] sm:$0xff]
  %v49 = vld [vmem:[%s1 + $0x80] sm:$0xff]
  %v50 = vld [vmem:[%s1 + $0x88] sm:$0xff]
  %v51 = vld [vmem:[%s1 + $0x90] sm:$0xff]
  %v52 = vld [vmem:[%s1 + $0x98] sm:$0xff]
  %v53 = vld [vmem:[%s1 + $0xa0] sm:$0xff]
  %v54 = vld [vmem:[%s1 + $0xa8] sm:$0xff]
  %v55 = vld [vmem:[%s1 + $0xb0] sm:$0xff]
  %v56 = vld [vmem:[%s1 + $0xb8] sm:$0xff]
  %v57 = vld [vmem:[%s1 + $0xc0] sm:$0xff]
  %v58 = vld [vmem:[%s1 + $0xc8] sm:$0xff]
  %v59 = vld [vmem:[%s1 + $0xd0] sm:$0xff]
  %v60 = vld [vmem:[%s1 + $0xd8] sm:$0xff]
  %v61 = vld [vmem:[%s1 + $0xe0] sm:$0xff]
  %v62 = vld [vmem:[%s1 + $0xe8] sm:$0xff]
  %v63 = vld [vmem:[%s1 + $0xf0] sm:$0xff]
  %v64 = vld [vmem:[%s1 + $0xf8] sm:$0xff]
  %v65 = vld [vmem:[%s1 + $0x100] sm:$0xff]
  %v66 = vld [vmem:[%s1 + $0x108] sm:$0xff]
  %v67 = vld [vmem:[%s1 + $0x110] sm:$0xff]
  %v68 = vld [vmem:[%s1 + $0x118] sm:$0xff]
  %v69 = vld [vmem:[%s1 + $0x120] sm:$0xff]
  %v70 = vld [vmem:[%s1 + $0x128] sm:$0xff]
  %v71 = vld [vmem:[%s1 + $0x130] sm:$0xff]
  %v72 = vld [vmem:[%s1 + $0x138] sm:$0xff]
  %v73 = vld [vmem:[%s1 + $0x140] sm:$0xff]
  %v74 = vld [vmem:[%s1 + $0x148] sm:$0xff]
  %v75 = vld [vmem:[%s1 + $0x150] sm:$0xff]
  %v76 = vld [vmem:[%s1 + $0x158] sm:$0xff]
  %v77 = vld [vmem:[%s1 + $0x160] sm:$0xff]
  %v78 = vld [vmem:[%s1 + $0x168] sm:$0xff]
  %v79 = vld [vmem:[%s1 + $0x170] sm:$0xff]
  %v80 = vld [vmem:[%s1 + $0x178] sm:$0xff]
  %v81 = vld [vmem:[%s1 + $0x180] sm:$0xff]
  %v82 = vld [vmem:[%s1 + $0x188] sm:$0xff]
  %v83 = vld [vmem:[%s1 + $0x190] sm:$0xff]
  %v84 = vld [vmem:[%s1 + $0x198] sm:$0xff]
  %v85 = vld [vmem:[%s1 + $0x1a0] sm:$0xff]
  %v86 = vld [vmem:[%s1 + $0x1a8] sm:$0xff]
  %v87 = vld [vmem:[%s1 + $0x1b0] sm:$0xff]
  %v88 = vld [vmem:[%s1 + $0x1b8] sm:$0xff]
  %v89 = vld [vmem:[%s1 + $0x1c0] sm:$0xff]
  %v90 = vld [vmem:[%s1 + $0x1c8] sm:$0xff]
  %v91 = vld [vmem:[%s1 + $0x1d0] sm:$0xff]
  %v92 = vld [vmem:[%s1 + $0x1d8] sm:$0xff]
  %v93 = vld [vmem:[%s1 + $0x1e0] sm:$0xff]
  %v94 = vld [vmem:[%s1 + $0x1e8] sm:$0xff]
  %v95 = vld [vmem:[%s1 + $0x1f0] sm:$0xff]
  %v96 = vld [vmem:[%s1 + $0x1f8] sm:$0xff]
  %v97 = vld [vmem:[%s2] sm:$0xf]
  %v99 = vlaneseq
  %v100 = vshrl.u32 %v99, 7
  %v101 = vsub.s32 0, %v100
  %v102 = vrot.slane %v97, %v101
  %v103 = vlaneseq
  %v104 = vshrl.u32 %v103, 7
  %v105 = vsub.s32 1, %v104
  %v106 = vrot.slane %v97, %v105
  %v107 = vlaneseq
  %v108 = vshrl.u32 %v107, 7
  %v109 = vsub.s32 2, %v108
  %v110 = vrot.slane %v97, %v109
  %v111 = vlaneseq
  %v112 = vshrl.u32 %v111, 7
  %v113 = vsub.s32 3, %v112
  %v114 = vrot.slane %v97, %v113
  %v135 = vunpack.c.l.b16 %v17
  %v136 = vunpack.c.h.b16 %v17
  %v137 = vunpack.c.l.b16 %v18
  %v138 = vunpack.c.h.b16 %v18
  %v139 = vunpack.c.l.b16 %v19
  %v140 = vunpack.c.h.b16 %v19
  %v141 = vunpack.c.l.b16 %v20
  %v142 = vunpack.c.h.b16 %v20
  %v143 = vunpack.c.l.b16 %v21
  %v144 = vunpack.c.h.b16 %v21
  %v145 = vunpack.c.l.b16 %v22
  %v146 = vunpack.c.h.b16 %v22
  %v147 = vunpack.c.l.b16 %v23
  %v148 = vunpack.c.h.b16 %v23
  %v149 = vunpack.c.l.b16 %v24
  %v150 = vunpack.c.h.b16 %v24
  %v151 = vunpack.c.l.b16 %v25
  %v152 = vunpack.c.h.b16 %v25
  %v153 = vunpack.c.l.b16 %v26
  %v154 = vunpack.c.h.b16 %v26
  %v155 = vunpack.c.l.b16 %v27
  %v156 = vunpack.c.h.b16 %v27
  %v157 = vunpack.c.l.b16 %v28
  %v158 = vunpack.c.h.b16 %v28
  %v159 = vunpack.c.l.b16 %v29
  %v160 = vunpack.c.h.b16 %v29
  %v161 = vunpack.c.l.b16 %v30
  %v162 = vunpack.c.h.b16 %v30
  %v163 = vunpack.c.l.b16 %v31
  %v164 = vunpack.c.h.b16 %v31
  %v165 = vunpack.c.l.b16 %v32
  %v166 = vunpack.c.h.b16 %v32
  %v167 = vpack.c.b16 %v137, %v135
  %v168 = vpack.c.b16 %v138, %v136
  %v169 = vpack.c.b16 %v141, %v139
  %v170 = vpack.c.b16 %v142, %v140
  %v171 = vpack.c.b16 %v145, %v143
  %v172 = vpack.c.b16 %v146, %v144
  %v173 = vpack.c.b16 %v149, %v147
  %v174 = vpack.c.b16 %v150, %v148
  %v175 = vpack.c.b16 %v153, %v151
  %v176 = vpack.c.b16 %v154, %v152
  %v177 = vpack.c.b16 %v157, %v155
  %v178 = vpack.c.b16 %v158, %v156
  %v179 = vpack.c.b16 %v161, %v159
  %v180 = vpack.c.b16 %v162, %v160
  %v181 = vpack.c.b16 %v165, %v163
  %v182 = vpack.c.b16 %v166, %v164
  %v263 = vunpack.c.l.b16 %v33
  %v264 = vunpack.c.h.b16 %v33
  %v265 = vunpack.c.l.b16 %v34
  %v266 = vunpack.c.h.b16 %v34
  %v267 = vunpack.c.l.b16 %v35
  %v268 = vunpack.c.h.b16 %v35
  %v269 = vunpack.c.l.b16 %v36
  %v270 = vunpack.c.h.b16 %v36
  %v271 = vunpack.c.l.b16 %v37
  %v272 = vunpack.c.h.b16 %v37
  %v273 = vunpack.c.l.b16 %v38
  %v274 = vunpack.c.h.b16 %v38
  %v275 = vunpack.c.l.b16 %v39
  %v276 = vunpack.c.h.b16 %v39
  %v277 = vunpack.c.l.b16 %v40
  %v278 = vunpack.c.h.b16 %v40
  %v279 = vunpack.c.l.b16 %v41
  %v280 = vunpack.c.h.b16 %v41
  %v281 = vunpack.c.l.b16 %v42
  %v282 = vunpack.c.h.b16 %v42
  %v283 = vunpack.c.l.b16 %v43
  %v284 = vunpack.c.h.b16 %v43
  %v285 = vunpack.c.l.b16 %v44
  %v286 = vunpack.c.h.b16 %v44
  %v287 = vunpack.c.l.b16 %v45
  %v288 = vunpack.c.h.b16 %v45
  %v289 = vunpack.c.l.b16 %v46
  %v290 = vunpack.c.h.b16 %v46
  %v291 = vunpack.c.l.b16 %v47
  %v292 = vunpack.c.h.b16 %v47
  %v293 = vunpack.c.l.b16 %v48
  %v294 = vunpack.c.h.b16 %v48
  %v295 = vunpack.c.l.b16 %v49
  %v296 = vunpack.c.h.b16 %v49
  %v297 = vunpack.c.l.b16 %v50
  %v298 = vunpack.c.h.b16 %v50
  %v299 = vunpack.c.l.b16 %v51
  %v300 = vunpack.c.h.b16 %v51
  %v301 = vunpack.c.l.b16 %v52
  %v302 = vunpack.c.h.b16 %v52
  %v303 = vunpack.c.l.b16 %v53
  %v304 = vunpack.c.h.b16 %v53
  %v305 = vunpack.c.l.b16 %v54
  %v306 = vunpack.c.h.b16 %v54
  %v307 = vunpack.c.l.b16 %v55
  %v308 = vunpack.c.h.b16 %v55
  %v309 = vunpack.c.l.b16 %v56
  %v310 = vunpack.c.h.b16 %v56
  %v311 = vunpack.c.l.b16 %v57
  %v312 = vunpack.c.h.b16 %v57
  %v313 = vunpack.c.l.b16 %v58
  %v314 = vunpack.c.h.b16 %v58
  %v315 = vunpack.c.l.b16 %v59
  %v316 = vunpack.c.h.b16 %v59
  %v317 = vunpack.c.l.b16 %v60
  %v318 = vunpack.c.h.b16 %v60
  %v319 = vunpack.c.l.b16 %v61
  %v320 = vunpack.c.h.b16 %v61
  %v321 = vunpack.c.l.b16 %v62
  %v322 = vunpack.c.h.b16 %v62
  %v323 = vunpack.c.l.b16 %v63
  %v324 = vunpack.c.h.b16 %v63
  %v325 = vunpack.c.l.b16 %v64
  %v326 = vunpack.c.h.b16 %v64
  %v327 = vunpack.c.l.b16 %v65
  %v328 = vunpack.c.h.b16 %v65
  %v329 = vunpack.c.l.b16 %v66
  %v330 = vunpack.c.h.b16 %v66
  %v331 = vunpack.c.l.b16 %v67
  %v332 = vunpack.c.h.b16 %v67
  %v333 = vunpack.c.l.b16 %v68
  %v334 = vunpack.c.h.b16 %v68
  %v335 = vunpack.c.l.b16 %v69
  %v336 = vunpack.c.h.b16 %v69
  %v337 = vunpack.c.l.b16 %v70
  %v338 = vunpack.c.h.b16 %v70
  %v339 = vunpack.c.l.b16 %v71
  %v340 = vunpack.c.h.b16 %v71
  %v341 = vunpack.c.l.b16 %v72
  %v342 = vunpack.c.h.b16 %v72
  %v343 = vunpack.c.l.b16 %v73
  %v344 = vunpack.c.h.b16 %v73
  %v345 = vunpack.c.l.b16 %v74
  %v346 = vunpack.c.h.b16 %v74
  %v347 = vunpack.c.l.b16 %v75
  %v348 = vunpack.c.h.b16 %v75
  %v349 = vunpack.c.l.b16 %v76
  %v350 = vunpack.c.h.b16 %v76
  %v351 = vunpack.c.l.b16 %v77
  %v352 = vunpack.c.h.b16 %v77
  %v353 = vunpack.c.l.b16 %v78
  %v354 = vunpack.c.h.b16 %v78
  %v355 = vunpack.c.l.b16 %v79
  %v356 = vunpack.c.h.b16 %v79
  %v357 = vunpack.c.l.b16 %v80
  %v358 = vunpack.c.h.b16 %v80
  %v359 = vunpack.c.l.b16 %v81
  %v360 = vunpack.c.h.b16 %v81
  %v361 = vunpack.c.l.b16 %v82
  %v362 = vunpack.c.h.b16 %v82
  %v363 = vunpack.c.l.b16 %v83
  %v364 = vunpack.c.h.b16 %v83
  %v365 = vunpack.c.l.b16 %v84
  %v366 = vunpack.c.h.b16 %v84
  %v367 = vunpack.c.l.b16 %v85
  %v368 = vunpack.c.h.b16 %v85
  %v369 = vunpack.c.l.b16 %v86
  %v370 = vunpack.c.h.b16 %v86
  %v371 = vunpack.c.l.b16 %v87
  %v372 = vunpack.c.h.b16 %v87
  %v373 = vunpack.c.l.b16 %v88
  %v374 = vunpack.c.h.b16 %v88
  %v375 = vunpack.c.l.b16 %v89
  %v376 = vunpack.c.h.b16 %v89
  %v377 = vunpack.c.l.b16 %v90
  %v378 = vunpack.c.h.b16 %v90
  %v379 = vunpack.c.l.b16 %v91
  %v380 = vunpack.c.h.b16 %v91
  %v381 = vunpack.c.l.b16 %v92
  %v382 = vunpack.c.h.b16 %v92
  %v383 = vunpack.c.l.b16 %v93
  %v384 = vunpack.c.h.b16 %v93
  %v385 = vunpack.c.l.b16 %v94
  %v386 = vunpack.c.h.b16 %v94
  %v387 = vunpack.c.l.b16 %v95
  %v388 = vunpack.c.h.b16 %v95
  %v389 = vunpack.c.l.b16 %v96
  %v390 = vunpack.c.h.b16 %v96
  %v391 = vpack.c.b16 %v267, %v263
  %v392 = vpack.c.b16 %v268, %v264
  %v393 = vpack.c.b16 %v269, %v265
  %v394 = vpack.c.b16 %v270, %v266
  %v395 = vpack.c.b16 %v275, %v271
  %v396 = vpack.c.b16 %v276, %v272
  %v397 = vpack.c.b16 %v277, %v273
  %v398 = vpack.c.b16 %v278, %v274
  %v399 = vpack.c.b16 %v283, %v279
  %v400 = vpack.c.b16 %v284, %v280
  %v401 = vpack.c.b16 %v285, %v281
  %v402 = vpack.c.b16 %v286, %v282
  %v403 = vpack.c.b16 %v291, %v287
  %v404 = vpack.c.b16 %v292, %v288
  %v405 = vpack.c.b16 %v293, %v289
  %v406 = vpack.c.b16 %v294, %v290
  %v407 = vpack.c.b16 %v299, %v295
  %v408 = vpack.c.b16 %v300, %v296
  %v409 = vpack.c.b16 %v301, %v297
  %v410 = vpack.c.b16 %v302, %v298
  %v411 = vpack.c.b16 %v307, %v303
  %v412 = vpack.c.b16 %v308, %v304
  %v413 = vpack.c.b16 %v309, %v305
  %v414 = vpack.c.b16 %v310, %v306
  %v415 = vpack.c.b16 %v315, %v311
  %v416 = vpack.c.b16 %v316, %v312
  %v417 = vpack.c.b16 %v317, %v313
  %v418 = vpack.c.b16 %v318, %v314
  %v419 = vpack.c.b16 %v323, %v319
  %v420 = vpack.c.b16 %v324, %v320
  %v421 = vpack.c.b16 %v325, %v321
  %v422 = vpack.c.b16 %v326, %v322
  %v423 = vpack.c.b16 %v331, %v327
  %v424 = vpack.c.b16 %v332, %v328
  %v425 = vpack.c.b16 %v333, %v329
  %v426 = vpack.c.b16 %v334, %v330
  %v427 = vpack.c.b16 %v339, %v335
  %v428 = vpack.c.b16 %v340, %v336
  %v429 = vpack.c.b16 %v341, %v337
  %v430 = vpack.c.b16 %v342, %v338
  %v431 = vpack.c.b16 %v347, %v343
  %v432 = vpack.c.b16 %v348, %v344
  %v433 = vpack.c.b16 %v349, %v345
  %v434 = vpack.c.b16 %v350, %v346
  %v435 = vpack.c.b16 %v355, %v351
  %v436 = vpack.c.b16 %v356, %v352
  %v437 = vpack.c.b16 %v357, %v353
  %v438 = vpack.c.b16 %v358, %v354
  %v439 = vpack.c.b16 %v363, %v359
  %v440 = vpack.c.b16 %v364, %v360
  %v441 = vpack.c.b16 %v365, %v361
  %v442 = vpack.c.b16 %v366, %v362
  %v443 = vpack.c.b16 %v371, %v367
  %v444 = vpack.c.b16 %v372, %v368
  %v445 = vpack.c.b16 %v373, %v369
  %v446 = vpack.c.b16 %v374, %v370
  %v447 = vpack.c.b16 %v379, %v375
  %v448 = vpack.c.b16 %v380, %v376
  %v449 = vpack.c.b16 %v381, %v377
  %v450 = vpack.c.b16 %v382, %v378
  %v451 = vpack.c.b16 %v387, %v383
  %v452 = vpack.c.b16 %v388, %v384
  %v453 = vpack.c.b16 %v389, %v385
  %v454 = vpack.c.b16 %v390, %v386
  %519 = vmatprep.subr.bf16.mxu0 %v392
  %520 = vmatpush1.bf16.msra.mxu0 %v391
  %521 = vmatprep.subr.bf16.mxu0 %v396
  %522 = vmatpush1.bf16.msra.mxu0 %v395
  %523 = vmatprep.subr.bf16.mxu0 %v400
  %524 = vmatpush1.bf16.msra.mxu0 %v399
  %525 = vmatprep.subr.bf16.mxu0 %v404
  %526 = vmatpush1.bf16.msra.mxu0 %v403
  %527 = vmatprep.subr.bf16.mxu0 %v408
  %528 = vmatpush1.bf16.msra.mxu0 %v407
  %529 = vmatprep.subr.bf16.mxu0 %v412
  %530 = vmatpush1.bf16.msra.mxu0 %v411
  %531 = vmatprep.subr.bf16.mxu0 %v416
  %532 = vmatpush1.bf16.msra.mxu0 %v415
  %533 = vmatprep.subr.bf16.mxu0 %v420
  %534 = vmatpush1.bf16.msra.mxu0 %v419
  %535 = vmatprep.subr.bf16.mxu0 %v424
  %536 = vmatpush1.bf16.msra.mxu0 %v423
  %537 = vmatprep.subr.bf16.mxu0 %v428
  %538 = vmatpush1.bf16.msra.mxu0 %v427
  %539 = vmatprep.subr.bf16.mxu0 %v432
  %540 = vmatpush1.bf16.msra.mxu0 %v431
  %541 = vmatprep.subr.bf16.mxu0 %v436
  %542 = vmatpush1.bf16.msra.mxu0 %v435
  %543 = vmatprep.subr.bf16.mxu0 %v440
  %544 = vmatpush1.bf16.msra.mxu0 %v439
  %545 = vmatprep.subr.bf16.mxu0 %v444
  %546 = vmatpush1.bf16.msra.mxu0 %v443
  %547 = vmatprep.subr.bf16.mxu0 %v448
  %548 = vmatpush1.bf16.msra.mxu0 %v447
  %549 = vmatprep.subr.bf16.mxu0 %v452
  %550 = vmatpush1.bf16.msra.mxu0 %v451
  %551 = vmatprep.mubr.bf16.mxu0 %v168
  %552 = vmatmul.mubr.bf16.gmra.mrb[0].mxu0 %v167
  %v553 = vpop.f32.mrb[0].mxu0
  %v554 = vadd.f32 %v102, %v553
  %v555 = vpop.f32.mrb[0].mxu0
  %v556 = vadd.f32 %v106, %v555
  %v557 = vpop.f32.mrb[0].mxu0
  %v558 = vadd.f32 %v102, %v557
  %v559 = vpop.f32.mrb[0].mxu0
  %v560 = vadd.f32 %v106, %v559
  %561 = vmatprep.mubr.bf16.mxu0 %v170
  %562 = vmatmul.mubr.bf16.gmra.mrb[0].mxu0 %v169
  %v563 = vpop.f32.mrb[0].mxu0
  %v564 = vadd.f32 %v102, %v563
  %v565 = vpop.f32.mrb[0].mxu0
  %v566 = vadd.f32 %v106, %v565
  %v567 = vpop.f32.mrb[0].mxu0
  %v568 = vadd.f32 %v102, %v567
  %v569 = vpop.f32.mrb[0].mxu0
  %v570 = vadd.f32 %v106, %v569
  %571 = vmatprep.mubr.bf16.mxu0 %v172
  %572 = vmatmul.mubr.bf16.gmra.mrb[0].mxu0 %v171
  %v573 = vpop.f32.mrb[0].mxu0
  %v574 = vadd.f32 %v102, %v573
  %v575 = vpop.f32.mrb[0].mxu0
  %v576 = vadd.f32 %v106, %v575
  %v577 = vpop.f32.mrb[0].mxu0
  %v578 = vadd.f32 %v102, %v577
  %v579 = vpop.f32.mrb[0].mxu0
  %v580 = vadd.f32 %v106, %v579
  %581 = vmatprep.mubr.bf16.mxu0 %v174
  %582 = vmatmul.mubr.bf16.gmra.mrb[0].mxu0 %v173
  %v583 = vpop.f32.mrb[0].mxu0
  %v584 = vadd.f32 %v102, %v583
  %v585 = vpop.f32.mrb[0].mxu0
  %v586 = vadd.f32 %v106, %v585
  %v587 = vpop.f32.mrb[0].mxu0
  %v588 = vadd.f32 %v102, %v587
  %v589 = vpop.f32.mrb[0].mxu0
  %v590 = vadd.f32 %v106, %v589
  %591 = vmatprep.mubr.bf16.mxu0 %v176
  %592 = vmatmul.mubr.bf16.gmra.mrb[0].mxu0 %v175
  %v593 = vpop.f32.mrb[0].mxu0
  %v594 = vadd.f32 %v102, %v593
  %v595 = vpop.f32.mrb[0].mxu0
  %v596 = vadd.f32 %v106, %v595
  %v597 = vpop.f32.mrb[0].mxu0
  %v598 = vadd.f32 %v102, %v597
  %v599 = vpop.f32.mrb[0].mxu0
  %v600 = vadd.f32 %v106, %v599
  %601 = vmatprep.mubr.bf16.mxu0 %v178
  %602 = vmatmul.mubr.bf16.gmra.mrb[0].mxu0 %v177
  %v603 = vpop.f32.mrb[0].mxu0
  %v604 = vadd.f32 %v102, %v603
  %v605 = vpop.f32.mrb[0].mxu0
  %v606 = vadd.f32 %v106, %v605
  %v607 = vpop.f32.mrb[0].mxu0
  %v608 = vadd.f32 %v102, %v607
  %v609 = vpop.f32.mrb[0].mxu0
  %v610 = vadd.f32 %v106, %v609
  %611 = vmatprep.mubr.bf16.mxu0 %v180
  %612 = vmatmul.mubr.bf16.gmra.mrb[0].mxu0 %v179
  %v613 = vpop.f32.mrb[0].mxu0
  %v614 = vadd.f32 %v102, %v613
  %v615 = vpop.f32.mrb[0].mxu0
  %v616 = vadd.f32 %v106, %v615
  %v617 = vpop.f32.mrb[0].mxu0
  %v618 = vadd.f32 %v102, %v617
  %v619 = vpop.f32.mrb[0].mxu0
  %v620 = vadd.f32 %v106, %v619
  %621 = vmatprep.mubr.bf16.mxu0 %v182
  %622 = vmatmul.mubr.bf16.gmra.mrb[0].mxu0 %v181
  %v623 = vpop.f32.mrb[0].mxu0
  %v624 = vadd.f32 %v102, %v623
  %v625 = vpop.f32.mrb[0].mxu0
  %v626 = vadd.f32 %v106, %v625
  %v627 = vpop.f32.mrb[0].mxu0
  %v628 = vadd.f32 %v102, %v627
  %v629 = vpop.f32.mrb[0].mxu0
  %v630 = vadd.f32 %v106, %v629
  %631 = vdwg.mxu0
  %632 = vmatprep.subr.bf16.mxu0 %v394
  %633 = vmatpush1.bf16.msra.mxu0 %v393
  %634 = vmatprep.subr.bf16.mxu0 %v398
  %635 = vmatpush1.bf16.msra.mxu0 %v397
  %636 = vmatprep.subr.bf16.mxu0 %v402
  %637 = vmatpush1.bf16.msra.mxu0 %v401
  %638 = vmatprep.subr.bf16.mxu0 %v406
  %639 = vmatpush1.bf16.msra.mxu0 %v405
  %640 = vmatprep.subr.bf16.mxu0 %v410
  %641 = vmatpush1.bf16.msra.mxu0 %v409
  %642 = vmatprep.subr.bf16.mxu0 %v414
  %643 = vmatpush1.bf16.msra.mxu0 %v413
  %644 = vmatprep.subr.bf16.mxu0 %v418
  %645 = vmatpush1.bf16.msra.mxu0 %v417
  %646 = vmatprep.subr.bf16.mxu0 %v422
  %647 = vmatpush1.bf16.msra.mxu0 %v421
  %648 = vmatprep.subr.bf16.mxu0 %v426
  %649 = vmatpush1.bf16.msra.mxu0 %v425
  %650 = vmatprep.subr.bf16.mxu0 %v430
  %651 = vmatpush1.bf16.msra.mxu0 %v429
  %652 = vmatprep.subr.bf16.mxu0 %v434
  %653 = vmatpush1.bf16.msra.mxu0 %v433
  %654 = vmatprep.subr.bf16.mxu0 %v438
  %655 = vmatpush1.bf16.msra.mxu0 %v437
  %656 = vmatprep.subr.bf16.mxu0 %v442
  %657 = vmatpush1.bf16.msra.mxu0 %v441
  %658 = vmatprep.subr.bf16.mxu0 %v446
  %659 = vmatpush1.bf16.msra.mxu0 %v445
  %660 = vmatprep.subr.bf16.mxu0 %v450
  %661 = vmatpush1.bf16.msra.mxu0 %v449
  %662 = vmatprep.subr.bf16.mxu0 %v454
  %663 = vmatpush1.bf16.msra.mxu0 %v453
  %664 = vmatprep.mubr.bf16.mxu0 %v168
  %665 = vmatmul.mubr.bf16.gmra.mrb[0].mxu0 %v167
  %v666 = vpop.f32.mrb[0].mxu0
  %v667 = vadd.f32 %v110, %v666
  %v668 = vpop.f32.mrb[0].mxu0
  %v669 = vadd.f32 %v114, %v668
  %v670 = vpop.f32.mrb[0].mxu0
  %v671 = vadd.f32 %v110, %v670
  %v672 = vpop.f32.mrb[0].mxu0
  %v673 = vadd.f32 %v114, %v672
  %674 = vmatprep.mubr.bf16.mxu0 %v170
  %675 = vmatmul.mubr.bf16.gmra.mrb[0].mxu0 %v169
  %v676 = vpop.f32.mrb[0].mxu0
  %v677 = vadd.f32 %v110, %v676
  %v678 = vpop.f32.mrb[0].mxu0
  %v679 = vadd.f32 %v114, %v678
  %v680 = vpop.f32.mrb[0].mxu0
  %v681 = vadd.f32 %v110, %v680
  %v682 = vpop.f32.mrb[0].mxu0
  %v683 = vadd.f32 %v114, %v682
  %684 = vmatprep.mubr.bf16.mxu0 %v172
  %685 = vmatmul.mubr.bf16.gmra.mrb[0].mxu0 %v171
  %v686 = vpop.f32.mrb[0].mxu0
  %v687 = vadd.f32 %v110, %v686
  %v688 = vpop.f32.mrb[0].mxu0
  %v689 = vadd.f32 %v114, %v688
  %v690 = vpop.f32.mrb[0].mxu0
  %v691 = vadd.f32 %v110, %v690
  %v692 = vpop.f32.mrb[0].mxu0
  %v693 = vadd.f32 %v114, %v692
  %694 = vmatprep.mubr.bf16.mxu0 %v174
  %695 = vmatmul.mubr.bf16.gmra.mrb[0].mxu0 %v173
  %v696 = vpop.f32.mrb[0].mxu0
  %v697 = vadd.f32 %v110, %v696
  %v698 = vpop.f32.mrb[0].mxu0
  %v699 = vadd.f32 %v114, %v698
  %v700 = vpop.f32.mrb[0].mxu0
  %v701 = vadd.f32 %v110, %v700
  %v702 = vpop.f32.mrb[0].mxu0
  %v703 = vadd.f32 %v114, %v702
  %704 = vmatprep.mubr.bf16.mxu0 %v176
  %705 = vmatmul.mubr.bf16.gmra.mrb[0].mxu0 %v175
  %v706 = vpop.f32.mrb[0].mxu0
  %v707 = vadd.f32 %v110, %v706
  %v708 = vpop.f32.mrb[0].mxu0
  %v709 = vadd.f32 %v114, %v708
  %v710 = vpop.f32.mrb[0].mxu0
  %v711 = vadd.f32 %v110, %v710
  %v712 = vpop.f32.mrb[0].mxu0
  %v713 = vadd.f32 %v114, %v712
  %714 = vmatprep.mubr.bf16.mxu0 %v178
  %715 = vmatmul.mubr.bf16.gmra.mrb[0].mxu0 %v177
  %v716 = vpop.f32.mrb[0].mxu0
  %v717 = vadd.f32 %v110, %v716
  %v718 = vpop.f32.mrb[0].mxu0
  %v719 = vadd.f32 %v114, %v718
  %v720 = vpop.f32.mrb[0].mxu0
  %v721 = vadd.f32 %v110, %v720
  %v722 = vpop.f32.mrb[0].mxu0
  %v723 = vadd.f32 %v114, %v722
  %724 = vmatprep.mubr.bf16.mxu0 %v180
  %725 = vmatmul.mubr.bf16.gmra.mrb[0].mxu0 %v179
  %v726 = vpop.f32.mrb[0].mxu0
  %v727 = vadd.f32 %v110, %v726
  %v728 = vpop.f32.mrb[0].mxu0
  %v729 = vadd.f32 %v114, %v728
  %v730 = vpop.f32.mrb[0].mxu0
  %v731 = vadd.f32 %v110, %v730
  %v732 = vpop.f32.mrb[0].mxu0
  %v733 = vadd.f32 %v114, %v732
  %734 = vmatprep.mubr.bf16.mxu0 %v182
  %735 = vmatmul.mubr.bf16.gmra.mrb[0].mxu0 %v181
  %v736 = vpop.f32.mrb[0].mxu0
  %v737 = vadd.f32 %v110, %v736
  %v738 = vpop.f32.mrb[0].mxu0
  %v739 = vadd.f32 %v114, %v738
  %v740 = vpop.f32.mrb[0].mxu0
  %v741 = vadd.f32 %v110, %v740
  %v742 = vpop.f32.mrb[0].mxu0
  %v743 = vadd.f32 %v114, %v742
  %744 = vdwg.mxu0
  %v745 = vld [vmem:[%s3] sm:$0xff]
  %v746 = vld [vmem:[%s3 + $0x8] sm:$0xff]
  %v747 = vld [vmem:[%s3 + $0x10] sm:$0xff]
  %v748 = vld [vmem:[%s3 + $0x18] sm:$0xff]
  %v749 = vld [vmem:[%s3 + $0x20] sm:$0xff]
  %v750 = vld [vmem:[%s3 + $0x28] sm:$0xff]
  %v751 = vld [vmem:[%s3 + $0x30] sm:$0xff]
  %v752 = vld [vmem:[%s3 + $0x38] sm:$0xff]
  %v753 = vld [vmem:[%s3 + $0x40] sm:$0xff]
  %v754 = vld [vmem:[%s3 + $0x48] sm:$0xff]
  %v755 = vld [vmem:[%s3 + $0x50] sm:$0xff]
  %v756 = vld [vmem:[%s3 + $0x58] sm:$0xff]
  %v757 = vld [vmem:[%s3 + $0x60] sm:$0xff]
  %v758 = vld [vmem:[%s3 + $0x68] sm:$0xff]
  %v759 = vld [vmem:[%s3 + $0x70] sm:$0xff]
  %v760 = vld [vmem:[%s3 + $0x78] sm:$0xff]
  %v761 = vld [vmem:[%s3 + $0x80] sm:$0xff]
  %v762 = vld [vmem:[%s3 + $0x88] sm:$0xff]
  %v763 = vld [vmem:[%s3 + $0x90] sm:$0xff]
  %v764 = vld [vmem:[%s3 + $0x98] sm:$0xff]
  %v765 = vld [vmem:[%s3 + $0xa0] sm:$0xff]
  %v766 = vld [vmem:[%s3 + $0xa8] sm:$0xff]
  %v767 = vld [vmem:[%s3 + $0xb0] sm:$0xff]
  %v768 = vld [vmem:[%s3 + $0xb8] sm:$0xff]
  %v769 = vld [vmem:[%s3 + $0xc0] sm:$0xff]
  %v770 = vld [vmem:[%s3 + $0xc8] sm:$0xff]
  %v771 = vld [vmem:[%s3 + $0xd0] sm:$0xff]
  %v772 = vld [vmem:[%s3 + $0xd8] sm:$0xff]
  %v773 = vld [vmem:[%s3 + $0xe0] sm:$0xff]
  %v774 = vld [vmem:[%s3 + $0xe8] sm:$0xff]
  %v775 = vld [vmem:[%s3 + $0xf0] sm:$0xff]
  %v776 = vld [vmem:[%s3 + $0xf8] sm:$0xff]
  %v777 = vld [vmem:[%s3 + $0x100] sm:$0xff]
  %v778 = vld [vmem:[%s3 + $0x108] sm:$0xff]
  %v779 = vld [vmem:[%s3 + $0x110] sm:$0xff]
  %v780 = vld [vmem:[%s3 + $0x118] sm:$0xff]
  %v781 = vld [vmem:[%s3 + $0x120] sm:$0xff]
  %v782 = vld [vmem:[%s3 + $0x128] sm:$0xff]
  %v783 = vld [vmem:[%s3 + $0x130] sm:$0xff]
  %v784 = vld [vmem:[%s3 + $0x138] sm:$0xff]
  %v785 = vld [vmem:[%s3 + $0x140] sm:$0xff]
  %v786 = vld [vmem:[%s3 + $0x148] sm:$0xff]
  %v787 = vld [vmem:[%s3 + $0x150] sm:$0xff]
  %v788 = vld [vmem:[%s3 + $0x158] sm:$0xff]
  %v789 = vld [vmem:[%s3 + $0x160] sm:$0xff]
  %v790 = vld [vmem:[%s3 + $0x168] sm:$0xff]
  %v791 = vld [vmem:[%s3 + $0x170] sm:$0xff]
  %v792 = vld [vmem:[%s3 + $0x178] sm:$0xff]
  %v793 = vld [vmem:[%s3 + $0x180] sm:$0xff]
  %v794 = vld [vmem:[%s3 + $0x188] sm:$0xff]
  %v795 = vld [vmem:[%s3 + $0x190] sm:$0xff]
  %v796 = vld [vmem:[%s3 + $0x198] sm:$0xff]
  %v797 = vld [vmem:[%s3 + $0x1a0] sm:$0xff]
  %v798 = vld [vmem:[%s3 + $0x1a8] sm:$0xff]
  %v799 = vld [vmem:[%s3 + $0x1b0] sm:$0xff]
  %v800 = vld [vmem:[%s3 + $0x1b8] sm:$0xff]
  %v801 = vld [vmem:[%s3 + $0x1c0] sm:$0xff]
  %v802 = vld [vmem:[%s3 + $0x1c8] sm:$0xff]
  %v803 = vld [vmem:[%s3 + $0x1d0] sm:$0xff]
  %v804 = vld [vmem:[%s3 + $0x1d8] sm:$0xff]
  %v805 = vld [vmem:[%s3 + $0x1e0] sm:$0xff]
  %v806 = vld [vmem:[%s3 + $0x1e8] sm:$0xff]
  %v807 = vld [vmem:[%s3 + $0x1f0] sm:$0xff]
  %v808 = vld [vmem:[%s3 + $0x1f8] sm:$0xff]
  %v809 = vadd.f32 %v554, %v745
  %v810 = vadd.f32 %v556, %v746
  %v811 = vadd.f32 %v667, %v747
  %v812 = vadd.f32 %v669, %v748
  %v813 = vadd.f32 %v558, %v749
  %v814 = vadd.f32 %v560, %v750
  %v815 = vadd.f32 %v671, %v751
  %v816 = vadd.f32 %v673, %v752
  %v817 = vadd.f32 %v564, %v753
  %v818 = vadd.f32 %v566, %v754
  %v819 = vadd.f32 %v677, %v755
  %v820 = vadd.f32 %v679, %v756
  %v821 = vadd.f32 %v568, %v757
  %v822 = vadd.f32 %v570, %v758
  %v823 = vadd.f32 %v681, %v759
  %v824 = vadd.f32 %v683, %v760
  %v825 = vadd.f32 %v574, %v761
  %v826 = vadd.f32 %v576, %v762
  %v827 = vadd.f32 %v687, %v763
  %v828 = vadd.f32 %v689, %v764
  %v829 = vadd.f32 %v578, %v765
  %v830 = vadd.f32 %v580, %v766
  %v831 = vadd.f32 %v691, %v767
  %v832 = vadd.f32 %v693, %v768
  %v833 = vadd.f32 %v584, %v769
  %v834 = vadd.f32 %v586, %v770
  %v835 = vadd.f32 %v697, %v771
  %v836 = vadd.f32 %v699, %v772
  %v837 = vadd.f32 %v588, %v773
  %v838 = vadd.f32 %v590, %v774
  %v839 = vadd.f32 %v701, %v775
  %v840 = vadd.f32 %v703, %v776
  %v841 = vadd.f32 %v594, %v777
  %v842 = vadd.f32 %v596, %v778
  %v843 = vadd.f32 %v707, %v779
  %v844 = vadd.f32 %v709, %v780
  %v845 = vadd.f32 %v598, %v781
  %v846 = vadd.f32 %v600, %v782
  %v847 = vadd.f32 %v711, %v783
  %v848 = vadd.f32 %v713, %v784
  %v849 = vadd.f32 %v604, %v785
  %v850 = vadd.f32 %v606, %v786
  %v851 = vadd.f32 %v717, %v787
  %v852 = vadd.f32 %v719, %v788
  %v853 = vadd.f32 %v608, %v789
  %v854 = vadd.f32 %v610, %v790
  %v855 = vadd.f32 %v721, %v791
  %v856 = vadd.f32 %v723, %v792
  %v857 = vadd.f32 %v614, %v793
  %v858 = vadd.f32 %v616, %v794
  %v859 = vadd.f32 %v727, %v795
  %v860 = vadd.f32 %v729, %v796
  %v861 = vadd.f32 %v618, %v797
  %v862 = vadd.f32 %v620, %v798
  %v863 = vadd.f32 %v731, %v799
  %v864 = vadd.f32 %v733, %v800
  %v865 = vadd.f32 %v624, %v801
  %v866 = vadd.f32 %v626, %v802
  %v867 = vadd.f32 %v737, %v803
  %v868 = vadd.f32 %v739, %v804
  %v869 = vadd.f32 %v628, %v805
  %v870 = vadd.f32 %v630, %v806
  %v871 = vadd.f32 %v741, %v807
  %v872 = vadd.f32 %v743, %v808
  %873 = vst [vmem:[%s4] sm:$0xff] %v809
  %874 = vst [vmem:[%s4 + $0x8] sm:$0xff] %v810
  %875 = vst [vmem:[%s4 + $0x10] sm:$0xff] %v811
  %876 = vst [vmem:[%s4 + $0x18] sm:$0xff] %v812
  %877 = vst [vmem:[%s4 + $0x20] sm:$0xff] %v813
  %878 = vst [vmem:[%s4 + $0x28] sm:$0xff] %v814
  %879 = vst [vmem:[%s4 + $0x30] sm:$0xff] %v815
  %880 = vst [vmem:[%s4 + $0x38] sm:$0xff] %v816
  %881 = vst [vmem:[%s4 + $0x40] sm:$0xff] %v817
  %882 = vst [vmem:[%s4 + $0x48] sm:$0xff] %v818
  %883 = vst [vmem:[%s4 + $0x50] sm:$0xff] %v819
  %884 = vst [vmem:[%s4 + $0x58] sm:$0xff] %v820
  %885 = vst [vmem:[%s4 + $0x60] sm:$0xff] %v821
  %886 = vst [vmem:[%s4 + $0x68] sm:$0xff] %v822
  %887 = vst [vmem:[%s4 + $0x70] sm:$0xff] %v823
  %888 = vst [vmem:[%s4 + $0x78] sm:$0xff] %v824
  %889 = vst [vmem:[%s4 + $0x80] sm:$0xff] %v825
  %890 = vst [vmem:[%s4 + $0x88] sm:$0xff] %v826
  %891 = vst [vmem:[%s4 + $0x90] sm:$0xff] %v827
  %892 = vst [vmem:[%s4 + $0x98] sm:$0xff] %v828
  %893 = vst [vmem:[%s4 + $0xa0] sm:$0xff] %v829
  %894 = vst [vmem:[%s4 + $0xa8] sm:$0xff] %v830
  %895 = vst [vmem:[%s4 + $0xb0] sm:$0xff] %v831
  %896 = vst [vmem:[%s4 + $0xb8] sm:$0xff] %v832
  %897 = vst [vmem:[%s4 + $0xc0] sm:$0xff] %v833
  %898 = vst [vmem:[%s4 + $0xc8] sm:$0xff] %v834
  %899 = vst [vmem:[%s4 + $0xd0] sm:$0xff] %v835
  %900 = vst [vmem:[%s4 + $0xd8] sm:$0xff] %v836
  %901 = vst [vmem:[%s4 + $0xe0] sm:$0xff] %v837
  %902 = vst [vmem:[%s4 + $0xe8] sm:$0xff] %v838
  %903 = vst [vmem:[%s4 + $0xf0] sm:$0xff] %v839
  %904 = vst [vmem:[%s4 + $0xf8] sm:$0xff] %v840
  %905 = vst [vmem:[%s4 + $0x100] sm:$0xff] %v841
  %906 = vst [vmem:[%s4 + $0x108] sm:$0xff] %v842
  %907 = vst [vmem:[%s4 + $0x110] sm:$0xff] %v843
  %908 = vst [vmem:[%s4 + $0x118] sm:$0xff] %v844
  %909 = vst [vmem:[%s4 + $0x120] sm:$0xff] %v845
  %910 = vst [vmem:[%s4 + $0x128] sm:$0xff] %v846
  %911 = vst [vmem:[%s4 + $0x130] sm:$0xff] %v847
  %912 = vst [vmem:[%s4 + $0x138] sm:$0xff] %v848
  %913 = vst [vmem:[%s4 + $0x140] sm:$0xff] %v849
  %914 = vst [vmem:[%s4 + $0x148] sm:$0xff] %v850
  %915 = vst [vmem:[%s4 + $0x150] sm:$0xff] %v851
  %916 = vst [vmem:[%s4 + $0x158] sm:$0xff] %v852
  %917 = vst [vmem:[%s4 + $0x160] sm:$0xff] %v853
  %918 = vst [vmem:[%s4 + $0x168] sm:$0xff] %v854
  %919 = vst [vmem:[%s4 + $0x170] sm:$0xff] %v855
  %920 = vst [vmem:[%s4 + $0x178] sm:$0xff] %v856
  %921 = vst [vmem:[%s4 + $0x180] sm:$0xff] %v857
  %922 = vst [vmem:[%s4 + $0x188] sm:$0xff] %v858
  %923 = vst [vmem:[%s4 + $0x190] sm:$0xff] %v859
  %924 = vst [vmem:[%s4 + $0x198] sm:$0xff] %v860
  %925 = vst [vmem:[%s4 + $0x1a0] sm:$0xff] %v861
  %926 = vst [vmem:[%s4 + $0x1a8] sm:$0xff] %v862
  %927 = vst [vmem:[%s4 + $0x1b0] sm:$0xff] %v863
  %928 = vst [vmem:[%s4 + $0x1b8] sm:$0xff] %v864
  %929 = vst [vmem:[%s4 + $0x1c0] sm:$0xff] %v865
  %930 = vst [vmem:[%s4 + $0x1c8] sm:$0xff] %v866
  %931 = vst [vmem:[%s4 + $0x1d0] sm:$0xff] %v867
  %932 = vst [vmem:[%s4 + $0x1d8] sm:$0xff] %v868
  %933 = vst [vmem:[%s4 + $0x1e0] sm:$0xff] %v869
  %934 = vst [vmem:[%s4 + $0x1e8] sm:$0xff] %v870
  %935 = vst [vmem:[%s4 + $0x1f0] sm:$0xff] %v871
  %936 = vst [vmem:[%s4 + $0x1f8] sm:$0xff] %v872
  // Predicated region
  $region18: #{_lambda_.3} parent=0 // pred_check
    _
  $region19: #{_lambda_.3} parent=0 // pred_check_branch
    %938 = sbr.rel (0) target = $region21
  $region20: #{_lambda_.3} parent=0 // pred_region
    _
  $region21: #{_lambda_.3} parent=0 // pred_fallthru
    _
  // Predicated region
  $region22: #{_lambda_.3} parent=0 // pred_check
    _
  $region23: #{_lambda_.3} parent=0 // pred_check_branch
    %940 = sbr.rel (0) target = $region25
  $region24: #{_lambda_.3} parent=0 // pred_region
    _
  $region25: #{_lambda_.3} parent=0 // pred_fallthru
    _

</llo_original>
